<compile_context>
chip_gen: v6e
topology: v6e:2x2x1
jax: 0.10.0
libtpu: 0.0.40
codegen_flags: <defaults>
</compile_context>

<pallas_src>
import functools

import jax
import jax.numpy as jnp
from jax import lax
from jax.experimental import pallas as pl
from jax.experimental.pallas import tpu as pltpu


# Tap order (dy, dx): matches the (ky, kx) ordering of the reshaped weights.
_TAPS = [(dy, dx) for dy in (-1, 0, 1) for dx in (-1, 0, 1)]

_CIN_PAD = 16   # every layer's Cin padded to 16 -> uniform, tile-aligned im2col
_TB_CAP = 16    # max images folded into the lane axis per grid step


# ----------------------------------------------------------------------------
# Fused kernel: one grid step processes TB images folded into the lane axis.
#   x_ref    : (1, 16, N)   f32, N = TB*H*W (channels-first, lane-dense)
#   masks_ref: (9, 16, N)   f32 0/1 tap-validity masks (pre-broadcast, resident)
#   add1_ref : (16, N)      f32 layer-1 bias + mountain-border contribution
#   wN_ref   : (CoutN, 144) bf16 im2col weights;  bN_ref: (CoutN, 1) f32 bias
#   o_ref    : (1, 4, N)    f32, per-image NCHW flatten order
# ----------------------------------------------------------------------------
def _conv4deep3_kernel(x_ref, masks_ref, add1_ref,
                       w1_ref, w2_ref, b2_ref, w3_ref, b3_ref, w4_ref, b4_ref,
                       o_ref, *, W):
    x = x_ref[0]                                       # (16, N) f32
    N = x.shape[-1]

    def conv_layer(h, w_ref, extra):
        taps = []
        for t, (dy, dx) in enumerate(_TAPS):
            offset = dy * W + dx                       # static int
            shifted = h if offset == 0 else pltpu.roll(h, (-offset) % N, 1)
            # Multiplicative mask zeroes out-of-image positions (including the
            # cross-image wrap positions introduced by the batch fold).
            taps.append((shifted * masks_ref[t]).astype(jnp.bfloat16))
        patches = jnp.concatenate(taps, axis=0)        # (144, N) bf16
        acc = jnp.dot(w_ref[...], patches,
                      preferred_element_type=jnp.float32)   # (Cout, N) f32
        return acc + extra

    # Layer 1: mountain padding folded into the precomputed additive map.
    h = conv_layer(x, w1_ref, add1_ref[...])
    h = jnp.maximum(h, 0.01 * h)                       # LeakyReLU (slope 0.01)

    # Layers 2, 3: zero padding.
    h = conv_layer(h, w2_ref, b2_ref[...])
    h = jnp.maximum(h, 0.01 * h)
    h = conv_layer(h, w3_ref, b3_ref[...])
    h = jnp.maximum(h, 0.01 * h)

    # Layer 4: zero padding + exact sigmoid.
    out = conv_layer(h, w4_ref, b4_ref[...])           # (4, N) f32
    out = 1.0 / (1.0 + jnp.exp(-out))
    o_ref[0] = out.astype(o_ref.dtype)


# ----------------------------------------------------------------------------
# Wrapper: layout plumbing (tiny, done in XLA once per call).
# ----------------------------------------------------------------------------
def _w_to_im2col(w, cin_pad):
    """(Cout, Cin, 3, 3) -> (Cout, 9*cin_pad) bf16, tap-major / channel-minor K,
    matching the kernel's im2col row ordering."""
    cout, cin, _, _ = w.shape
    if cin_pad > cin:
        w = jnp.pad(w, ((0, 0), (0, cin_pad - cin), (0, 0), (0, 0)))
        cin = cin_pad
    return jnp.transpose(w, (0, 2, 3, 1)).reshape(cout, 9 * cin).astype(jnp.bfloat16)


def conv4deep3_forward(x_nchw, params):
    B, C, H, W = x_nchw.shape
    HW = H * W

    # TB images per grid step: big enough to amortize per-step overhead, capped
    # for VMEM, and chosen so v7x still has >= 2 grid steps when B >= 2.
    TB = max(1, min(_TB_CAP, (B + 1) // 2))
    steps = -(-B // TB)                  # cdiv
    B_pad = steps * TB
    N = TB * HW

    # Input: (B, C, HW) -> pad channels to 16 / batch to B_pad, fold TB images
    # into the lane axis -> (steps, 16, TB*HW).
    x = x_nchw.reshape(B, C, HW).astype(jnp.float32)
    x = jnp.pad(x, ((0, B_pad - B), (0, _CIN_PAD - C), (0, 0)))
    x = x.reshape(steps, TB, _CIN_PAD, HW).transpose(0, 2, 1, 3)
    x = x.reshape(steps, _CIN_PAD, N)

    # Tap-validity masks (f32 0/1), tiled across the TB folded images and
    # pre-broadcast across channels -> resident (9, 16, N) kernel input.
    q = jnp.arange(HW, dtype=jnp.int32)
    row, col = q // W, q % W
    valid = jnp.stack([((row + dy >= 0) & (row + dy < H) &
                        (col + dx >= 0) & (col + dx < W))
                       for dy, dx in _TAPS]).astype(jnp.float32)      # (9, HW)
    masks = jnp.broadcast_to(jnp.tile(valid, (1, TB))[:, None, :],
                             (9, _CIN_PAD, N))                        # (9, 16, N)

    # Layer-1 additive map: bias + mountain-border contribution (border pixel
    # is 1 on channel 0, 0 elsewhere -> sum of w1[:,0,ky,kx] over invalid taps).
    w1, b1 = params["w1"], params["b1"]
    border = jnp.einsum("ot,tp->op", w1[:, 0].reshape(16, 9), 1.0 - valid)
    add1 = jnp.tile(b1[:, None] + border, (1, TB)).astype(jnp.float32)  # (16, N)

    w1m = _w_to_im2col(w1, _CIN_PAD)
    w2m = _w_to_im2col(params["w2"], _CIN_PAD)
    w3m = _w_to_im2col(params["w3"], _CIN_PAD)
    w4m = _w_to_im2col(params["w4"], _CIN_PAD)
    b2 = params["b2"].reshape(-1, 1).astype(jnp.float32)
    b3 = params["b3"].reshape(-1, 1).astype(jnp.float32)
    b4 = params["b4"].reshape(-1, 1).astype(jnp.float32)

    kernel = functools.partial(_conv4deep3_kernel, W=W)

    def resident(arr):
        zeros = (0,) * arr.ndim
        return pl.BlockSpec(arr.shape, lambda g: zeros)

    out = pl.pallas_call(
        kernel,
        out_shape=jax.ShapeDtypeStruct((steps, 4, N), jnp.float32),
        grid=(steps,),
        in_specs=[
            pl.BlockSpec((1, _CIN_PAD, N), lambda g: (g, 0, 0)),
            resident(masks), resident(add1),
            resident(w1m), resident(w2m), resident(b2),
            resident(w3m), resident(b3), resident(w4m), resident(b4),
        ],
        out_specs=pl.BlockSpec((1, 4, N), lambda g: (g, 0, 0)),
        compiler_params=pltpu.CompilerParams(
            dimension_semantics=("parallel",)),
    )(x, masks, add1, w1m, w2m, b2, w3m, b3, w4m, b4)

    # Undo the batch fold; per-image layout is already NCHW flatten order.
    out = out.reshape(steps, 4, TB, HW).transpose(0, 2, 1, 3)
    out = out.reshape(B_pad, 4 * HW)
    return out[:B]


# ----------------------------------------------------------------------------
# Params (mimic PyTorch Conv2d default init) + pure-JAX reference for checking.
# ----------------------------------------------------------------------------
def init_params(key):
    channels = [(4, 16), (16, 16), (16, 16), (16, 4)]
    params = {}
    for i, (cin, cout) in enumerate(channels, start=1):
        key, kw, kb = jax.random.split(key, 3)
        bound = 1.0 / jnp.sqrt(cin * 3.0 * 3.0)
        params[f"w{i}"] = jax.random.uniform(
            kw, (cout, cin, 3, 3), jnp.float32, -bound, bound)
        params[f"b{i}"] = jax.random.uniform(
            kb, (cout,), jnp.float32, -bound, bound)
    return params


def _reference_forward(x_nchw, params):
    B, C, H, W = x_nchw.shape
    xp = jnp.zeros((B, C, H + 2, W + 2), x_nchw.dtype)
    xp = xp.at[:, 0, :, :].set(1.0)                        # mountain border
    xp = xp.at[:, :, 1:H + 1, 1:W + 1].set(x_nchw)
    dn = ("NCHW", "OIHW", "NCHW")
    h = lax.conv_general_dilated(xp, params["w1"], (1, 1), "VALID",
                                 dimension_numbers=dn)
    h = h + params["b1"][None, :, None, None]
    h = jnp.where(h >= 0, h, 0.01 * h)
    for i in (2, 3):
        h = lax.conv_general_dilated(h, params[f"w{i}"], (1, 1), "SAME",
                                     dimension_numbers=dn)
        h = h + params[f"b{i}"][None, :, None, None]
        h = jnp.where(h >= 0, h, 0.01 * h)
    h = lax.conv_general_dilated(h, params["w4"], (1, 1), "SAME",
                                 dimension_numbers=dn)
    h = h + params["b4"][None, :, None, None]
    h = jax.nn.sigmoid(h)
    return h.reshape(B, -1)


if __name__ == "__main__":
    key = jax.random.PRNGKey(0)
    key, kx = jax.random.split(key)
    x = jax.random.normal(kx, (2, 4, 16, 16), jnp.float32)  # NCHW like PyTorch
    params = init_params(key)

    y = jax.jit(conv4deep3_forward)(x, params)
    jax.block_until_ready(y)
    assert y.shape == (2, 4 * 16 * 16)

    y_ref = _reference_forward(x, params)
    max_err = float(jnp.max(jnp.abs(y - y_ref)))
    # bf16 matmul operands (f32 accumulation) vs the f32 reference.
    assert max_err < 1e-2, f"mismatch vs reference: max abs err {max_err}"

    print("KERNEL_OK")
</pallas_src>

<mosaic_0001>
module attributes {stable_mosaic.version = 11 : i64} {
  func.func @_conv4deep3_kernel(%arg0: i32, %arg1: memref<1x16x256xf32, #tpu.memory_space<vmem>>, %arg2: memref<9x16x256xf32, #tpu.memory_space<vmem>>, %arg3: memref<16x256xf32, #tpu.memory_space<vmem>>, %arg4: memref<16x144xbf16, #tpu.memory_space<vmem>>, %arg5: memref<16x144xbf16, #tpu.memory_space<vmem>>, %arg6: memref<16x1xf32, #tpu.memory_space<vmem>>, %arg7: memref<16x144xbf16, #tpu.memory_space<vmem>>, %arg8: memref<16x1xf32, #tpu.memory_space<vmem>>, %arg9: memref<4x144xbf16, #tpu.memory_space<vmem>>, %arg10: memref<4x1xf32, #tpu.memory_space<vmem>>, %arg11: memref<1x4x256xf32, #tpu.memory_space<vmem>>) attributes {dimension_semantics = [#tpu.dimension_semantics<parallel>], iteration_bounds = array<i64: 2>, scalar_prefetch = 0 : i64, scratch_operands = 0 : i64, tpu.core_type = #tpu.core_type<tc>, window_params = [{transform_indices = @transform_0, window_bounds = array<i64: 1, 16, 256>}, {pipeline_mode = #tpu.pipeline_mode<synchronous>, transform_indices = @transform_1, window_bounds = array<i64: 9, 16, 256>}, {pipeline_mode = #tpu.pipeline_mode<synchronous>, transform_indices = @transform_2, window_bounds = array<i64: 16, 256>}, {pipeline_mode = #tpu.pipeline_mode<synchronous>, transform_indices = @transform_3, window_bounds = array<i64: 16, 144>}, {pipeline_mode = #tpu.pipeline_mode<synchronous>, transform_indices = @transform_4, window_bounds = array<i64: 16, 144>}, {pipeline_mode = #tpu.pipeline_mode<synchronous>, transform_indices = @transform_5, window_bounds = array<i64: 16, 1>}, {pipeline_mode = #tpu.pipeline_mode<synchronous>, transform_indices = @transform_6, window_bounds = array<i64: 16, 144>}, {pipeline_mode = #tpu.pipeline_mode<synchronous>, transform_indices = @transform_7, window_bounds = array<i64: 16, 1>}, {pipeline_mode = #tpu.pipeline_mode<synchronous>, transform_indices = @transform_8, window_bounds = array<i64: 4, 144>}, {pipeline_mode = #tpu.pipeline_mode<synchronous>, transform_indices = @transform_9, window_bounds = array<i64: 4, 1>}, {transform_indices = @transform_10, window_bounds = array<i64: 1, 4, 256>}]} {
    %c0 = arith.constant 0 : index
    %c0_0 = arith.constant 0 : index
    %c0_1 = arith.constant 0 : index
    %0 = vector.load %arg1[%c0, %c0_0, %c0_1] : memref<1x16x256xf32, #tpu.memory_space<vmem>>, vector<1x16x256xf32>
    %1 = vector.shape_cast %0 : vector<1x16x256xf32> to vector<16x256xf32>
    %c0_2 = arith.constant 0 : index
    %c0_3 = arith.constant 0 : index
    %2 = vector.load %arg3[%c0_2, %c0_3] : memref<16x256xf32, #tpu.memory_space<vmem>>, vector<16x256xf32>
    %c17_i32 = arith.constant 17 : i32
    %3 = tpu.dynamic_rotate %1 by %c17_i32 dim 1 : vector<16x256xf32>, i32 -> vector<16x256xf32>
    %c0_4 = arith.constant 0 : index
    %c0_5 = arith.constant 0 : index
    %c0_6 = arith.constant 0 : index
    %4 = vector.load %arg2[%c0_4, %c0_5, %c0_6] : memref<9x16x256xf32, #tpu.memory_space<vmem>>, vector<1x16x256xf32>
    %5 = vector.shape_cast %4 : vector<1x16x256xf32> to vector<16x256xf32>
    %6 = arith.mulf %3, %5 : vector<16x256xf32>
    %7 = arith.truncf %6 : vector<16x256xf32> to vector<16x256xbf16>
    %c16_i32 = arith.constant 16 : i32
    %8 = tpu.dynamic_rotate %1 by %c16_i32 dim 1 : vector<16x256xf32>, i32 -> vector<16x256xf32>
    %c1 = arith.constant 1 : index
    %c0_7 = arith.constant 0 : index
    %c0_8 = arith.constant 0 : index
    %9 = vector.load %arg2[%c1, %c0_7, %c0_8] : memref<9x16x256xf32, #tpu.memory_space<vmem>>, vector<1x16x256xf32>
    %10 = vector.shape_cast %9 : vector<1x16x256xf32> to vector<16x256xf32>
    %11 = arith.mulf %8, %10 : vector<16x256xf32>
    %12 = arith.truncf %11 : vector<16x256xf32> to vector<16x256xbf16>
    %c15_i32 = arith.constant 15 : i32
    %13 = tpu.dynamic_rotate %1 by %c15_i32 dim 1 : vector<16x256xf32>, i32 -> vector<16x256xf32>
    %c2 = arith.constant 2 : index
    %c0_9 = arith.constant 0 : index
    %c0_10 = arith.constant 0 : index
    %14 = vector.load %arg2[%c2, %c0_9, %c0_10] : memref<9x16x256xf32, #tpu.memory_space<vmem>>, vector<1x16x256xf32>
    %15 = vector.shape_cast %14 : vector<1x16x256xf32> to vector<16x256xf32>
    %16 = arith.mulf %13, %15 : vector<16x256xf32>
    %17 = arith.truncf %16 : vector<16x256xf32> to vector<16x256xbf16>
    %c1_i32 = arith.constant 1 : i32
    %18 = tpu.dynamic_rotate %1 by %c1_i32 dim 1 : vector<16x256xf32>, i32 -> vector<16x256xf32>
    %c3 = arith.constant 3 : index
    %c0_11 = arith.constant 0 : index
    %c0_12 = arith.constant 0 : index
    %19 = vector.load %arg2[%c3, %c0_11, %c0_12] : memref<9x16x256xf32, #tpu.memory_space<vmem>>, vector<1x16x256xf32>
    %20 = vector.shape_cast %19 : vector<1x16x256xf32> to vector<16x256xf32>
    %21 = arith.mulf %18, %20 : vector<16x256xf32>
    %22 = arith.truncf %21 : vector<16x256xf32> to vector<16x256xbf16>
    %c4 = arith.constant 4 : index
    %c0_13 = arith.constant 0 : index
    %c0_14 = arith.constant 0 : index
    %23 = vector.load %arg2[%c4, %c0_13, %c0_14] : memref<9x16x256xf32, #tpu.memory_space<vmem>>, vector<1x16x256xf32>
    %24 = vector.shape_cast %23 : vector<1x16x256xf32> to vector<16x256xf32>
    %25 = arith.mulf %1, %24 : vector<16x256xf32>
    %26 = arith.truncf %25 : vector<16x256xf32> to vector<16x256xbf16>
    %c255_i32 = arith.constant 255 : i32
    %27 = tpu.dynamic_rotate %1 by %c255_i32 dim 1 : vector<16x256xf32>, i32 -> vector<16x256xf32>
    %c5 = arith.constant 5 : index
    %c0_15 = arith.constant 0 : index
    %c0_16 = arith.constant 0 : index
    %28 = vector.load %arg2[%c5, %c0_15, %c0_16] : memref<9x16x256xf32, #tpu.memory_space<vmem>>, vector<1x16x256xf32>
    %29 = vector.shape_cast %28 : vector<1x16x256xf32> to vector<16x256xf32>
    %30 = arith.mulf %27, %29 : vector<16x256xf32>
    %31 = arith.truncf %30 : vector<16x256xf32> to vector<16x256xbf16>
    %c241_i32 = arith.constant 241 : i32
    %32 = tpu.dynamic_rotate %1 by %c241_i32 dim 1 : vector<16x256xf32>, i32 -> vector<16x256xf32>
    %c6 = arith.constant 6 : index
    %c0_17 = arith.constant 0 : index
    %c0_18 = arith.constant 0 : index
    %33 = vector.load %arg2[%c6, %c0_17, %c0_18] : memref<9x16x256xf32, #tpu.memory_space<vmem>>, vector<1x16x256xf32>
    %34 = vector.shape_cast %33 : vector<1x16x256xf32> to vector<16x256xf32>
    %35 = arith.mulf %32, %34 : vector<16x256xf32>
    %36 = arith.truncf %35 : vector<16x256xf32> to vector<16x256xbf16>
    %c240_i32 = arith.constant 240 : i32
    %37 = tpu.dynamic_rotate %1 by %c240_i32 dim 1 : vector<16x256xf32>, i32 -> vector<16x256xf32>
    %c7 = arith.constant 7 : index
    %c0_19 = arith.constant 0 : index
    %c0_20 = arith.constant 0 : index
    %38 = vector.load %arg2[%c7, %c0_19, %c0_20] : memref<9x16x256xf32, #tpu.memory_space<vmem>>, vector<1x16x256xf32>
    %39 = vector.shape_cast %38 : vector<1x16x256xf32> to vector<16x256xf32>
    %40 = arith.mulf %37, %39 : vector<16x256xf32>
    %41 = arith.truncf %40 : vector<16x256xf32> to vector<16x256xbf16>
    %c239_i32 = arith.constant 239 : i32
    %42 = tpu.dynamic_rotate %1 by %c239_i32 dim 1 : vector<16x256xf32>, i32 -> vector<16x256xf32>
    %c8 = arith.constant 8 : index
    %c0_21 = arith.constant 0 : index
    %c0_22 = arith.constant 0 : index
    %43 = vector.load %arg2[%c8, %c0_21, %c0_22] : memref<9x16x256xf32, #tpu.memory_space<vmem>>, vector<1x16x256xf32>
    %44 = vector.shape_cast %43 : vector<1x16x256xf32> to vector<16x256xf32>
    %45 = arith.mulf %42, %44 : vector<16x256xf32>
    %46 = arith.truncf %45 : vector<16x256xf32> to vector<16x256xbf16>
    %47 = tpu.concatenate %7, %12, %17, %22, %26, %31, %36, %41, %46 in 0 : vector<16x256xbf16>, vector<16x256xbf16>, vector<16x256xbf16>, vector<16x256xbf16>, vector<16x256xbf16>, vector<16x256xbf16>, vector<16x256xbf16>, vector<16x256xbf16>, vector<16x256xbf16> -> vector<144x256xbf16>
    %c0_23 = arith.constant 0 : index
    %c0_24 = arith.constant 0 : index
    %48 = vector.load %arg4[%c0_23, %c0_24] : memref<16x144xbf16, #tpu.memory_space<vmem>>, vector<16x144xbf16>
    %cst = arith.constant dense<0.000000e+00> : vector<16x256xf32>
    %49 = tpu.matmul %48, %47, %cst {dimension_numbers = #tpu.dot_dimension_numbers<[1], [0], [0], [1], [0, 0, 1, 1], [], []>} : vector<16x144xbf16>, vector<144x256xbf16>, vector<16x256xf32> -> vector<16x256xf32>
    %50 = arith.addf %49, %2 : vector<16x256xf32>
    %cst_25 = arith.constant 0.00999999977 : f32
    %51 = vector.broadcast %cst_25 : f32 to vector<16x256xf32>
    %52 = arith.mulf %51, %50 : vector<16x256xf32>
    %53 = arith.maximumf %50, %52 : vector<16x256xf32>
    %c0_26 = arith.constant 0 : index
    %c0_27 = arith.constant 0 : index
    %54 = vector.load %arg6[%c0_26, %c0_27] : memref<16x1xf32, #tpu.memory_space<vmem>>, vector<16x1xf32>
    %c17_i32_28 = arith.constant 17 : i32
    %55 = tpu.dynamic_rotate %53 by %c17_i32_28 dim 1 : vector<16x256xf32>, i32 -> vector<16x256xf32>
    %c0_29 = arith.constant 0 : index
    %c0_30 = arith.constant 0 : index
    %c0_31 = arith.constant 0 : index
    %56 = vector.load %arg2[%c0_29, %c0_30, %c0_31] : memref<9x16x256xf32, #tpu.memory_space<vmem>>, vector<1x16x256xf32>
    %57 = vector.shape_cast %56 : vector<1x16x256xf32> to vector<16x256xf32>
    %58 = arith.mulf %55, %57 : vector<16x256xf32>
    %59 = arith.truncf %58 : vector<16x256xf32> to vector<16x256xbf16>
    %c16_i32_32 = arith.constant 16 : i32
    %60 = tpu.dynamic_rotate %53 by %c16_i32_32 dim 1 : vector<16x256xf32>, i32 -> vector<16x256xf32>
    %c1_33 = arith.constant 1 : index
    %c0_34 = arith.constant 0 : index
    %c0_35 = arith.constant 0 : index
    %61 = vector.load %arg2[%c1_33, %c0_34, %c0_35] : memref<9x16x256xf32, #tpu.memory_space<vmem>>, vector<1x16x256xf32>
    %62 = vector.shape_cast %61 : vector<1x16x256xf32> to vector<16x256xf32>
    %63 = arith.mulf %60, %62 : vector<16x256xf32>
    %64 = arith.truncf %63 : vector<16x256xf32> to vector<16x256xbf16>
    %c15_i32_36 = arith.constant 15 : i32
    %65 = tpu.dynamic_rotate %53 by %c15_i32_36 dim 1 : vector<16x256xf32>, i32 -> vector<16x256xf32>
    %c2_37 = arith.constant 2 : index
    %c0_38 = arith.constant 0 : index
    %c0_39 = arith.constant 0 : index
    %66 = vector.load %arg2[%c2_37, %c0_38, %c0_39] : memref<9x16x256xf32, #tpu.memory_space<vmem>>, vector<1x16x256xf32>
    %67 = vector.shape_cast %66 : vector<1x16x256xf32> to vector<16x256xf32>
    %68 = arith.mulf %65, %67 : vector<16x256xf32>
    %69 = arith.truncf %68 : vector<16x256xf32> to vector<16x256xbf16>
    %c1_i32_40 = arith.constant 1 : i32
    %70 = tpu.dynamic_rotate %53 by %c1_i32_40 dim 1 : vector<16x256xf32>, i32 -> vector<16x256xf32>
    %c3_41 = arith.constant 3 : index
    %c0_42 = arith.constant 0 : index
    %c0_43 = arith.constant 0 : index
    %71 = vector.load %arg2[%c3_41, %c0_42, %c0_43] : memref<9x16x256xf32, #tpu.memory_space<vmem>>, vector<1x16x256xf32>
    %72 = vector.shape_cast %71 : vector<1x16x256xf32> to vector<16x256xf32>
    %73 = arith.mulf %70, %72 : vector<16x256xf32>
    %74 = arith.truncf %73 : vector<16x256xf32> to vector<16x256xbf16>
    %c4_44 = arith.constant 4 : index
    %c0_45 = arith.constant 0 : index
    %c0_46 = arith.constant 0 : index
    %75 = vector.load %arg2[%c4_44, %c0_45, %c0_46] : memref<9x16x256xf32, #tpu.memory_space<vmem>>, vector<1x16x256xf32>
    %76 = vector.shape_cast %75 : vector<1x16x256xf32> to vector<16x256xf32>
    %77 = arith.mulf %53, %76 : vector<16x256xf32>
    %78 = arith.truncf %77 : vector<16x256xf32> to vector<16x256xbf16>
    %c255_i32_47 = arith.constant 255 : i32
    %79 = tpu.dynamic_rotate %53 by %c255_i32_47 dim 1 : vector<16x256xf32>, i32 -> vector<16x256xf32>
    %c5_48 = arith.constant 5 : index
    %c0_49 = arith.constant 0 : index
    %c0_50 = arith.constant 0 : index
    %80 = vector.load %arg2[%c5_48, %c0_49, %c0_50] : memref<9x16x256xf32, #tpu.memory_space<vmem>>, vector<1x16x256xf32>
    %81 = vector.shape_cast %80 : vector<1x16x256xf32> to vector<16x256xf32>
    %82 = arith.mulf %79, %81 : vector<16x256xf32>
    %83 = arith.truncf %82 : vector<16x256xf32> to vector<16x256xbf16>
    %c241_i32_51 = arith.constant 241 : i32
    %84 = tpu.dynamic_rotate %53 by %c241_i32_51 dim 1 : vector<16x256xf32>, i32 -> vector<16x256xf32>
    %c6_52 = arith.constant 6 : index
    %c0_53 = arith.constant 0 : index
    %c0_54 = arith.constant 0 : index
    %85 = vector.load %arg2[%c6_52, %c0_53, %c0_54] : memref<9x16x256xf32, #tpu.memory_space<vmem>>, vector<1x16x256xf32>
    %86 = vector.shape_cast %85 : vector<1x16x256xf32> to vector<16x256xf32>
    %87 = arith.mulf %84, %86 : vector<16x256xf32>
    %88 = arith.truncf %87 : vector<16x256xf32> to vector<16x256xbf16>
    %c240_i32_55 = arith.constant 240 : i32
    %89 = tpu.dynamic_rotate %53 by %c240_i32_55 dim 1 : vector<16x256xf32>, i32 -> vector<16x256xf32>
    %c7_56 = arith.constant 7 : index
    %c0_57 = arith.constant 0 : index
    %c0_58 = arith.constant 0 : index
    %90 = vector.load %arg2[%c7_56, %c0_57, %c0_58] : memref<9x16x256xf32, #tpu.memory_space<vmem>>, vector<1x16x256xf32>
    %91 = vector.shape_cast %90 : vector<1x16x256xf32> to vector<16x256xf32>
    %92 = arith.mulf %89, %91 : vector<16x256xf32>
    %93 = arith.truncf %92 : vector<16x256xf32> to vector<16x256xbf16>
    %c239_i32_59 = arith.constant 239 : i32
    %94 = tpu.dynamic_rotate %53 by %c239_i32_59 dim 1 : vector<16x256xf32>, i32 -> vector<16x256xf32>
    %c8_60 = arith.constant 8 : index
    %c0_61 = arith.constant 0 : index
    %c0_62 = arith.constant 0 : index
    %95 = vector.load %arg2[%c8_60, %c0_61, %c0_62] : memref<9x16x256xf32, #tpu.memory_space<vmem>>, vector<1x16x256xf32>
    %96 = vector.shape_cast %95 : vector<1x16x256xf32> to vector<16x256xf32>
    %97 = arith.mulf %94, %96 : vector<16x256xf32>
    %98 = arith.truncf %97 : vector<16x256xf32> to vector<16x256xbf16>
    %99 = tpu.concatenate %59, %64, %69, %74, %78, %83, %88, %93, %98 in 0 : vector<16x256xbf16>, vector<16x256xbf16>, vector<16x256xbf16>, vector<16x256xbf16>, vector<16x256xbf16>, vector<16x256xbf16>, vector<16x256xbf16>, vector<16x256xbf16>, vector<16x256xbf16> -> vector<144x256xbf16>
    %c0_63 = arith.constant 0 : index
    %c0_64 = arith.constant 0 : index
    %100 = vector.load %arg5[%c0_63, %c0_64] : memref<16x144xbf16, #tpu.memory_space<vmem>>, vector<16x144xbf16>
    %cst_65 = arith.constant dense<0.000000e+00> : vector<16x256xf32>
    %101 = tpu.matmul %100, %99, %cst_65 {dimension_numbers = #tpu.dot_dimension_numbers<[1], [0], [0], [1], [0, 0, 1, 1], [], []>} : vector<16x144xbf16>, vector<144x256xbf16>, vector<16x256xf32> -> vector<16x256xf32>
    %102 = vector.broadcast %54 : vector<16x1xf32> to vector<16x256xf32>
    %103 = arith.addf %101, %102 : vector<16x256xf32>
    %cst_66 = arith.constant 0.00999999977 : f32
    %104 = vector.broadcast %cst_66 : f32 to vector<16x256xf32>
    %105 = arith.mulf %104, %103 : vector<16x256xf32>
    %106 = arith.maximumf %103, %105 : vector<16x256xf32>
    %c0_67 = arith.constant 0 : index
    %c0_68 = arith.constant 0 : index
    %107 = vector.load %arg8[%c0_67, %c0_68] : memref<16x1xf32, #tpu.memory_space<vmem>>, vector<16x1xf32>
    %c17_i32_69 = arith.constant 17 : i32
    %108 = tpu.dynamic_rotate %106 by %c17_i32_69 dim 1 : vector<16x256xf32>, i32 -> vector<16x256xf32>
    %c0_70 = arith.constant 0 : index
    %c0_71 = arith.constant 0 : index
    %c0_72 = arith.constant 0 : index
    %109 = vector.load %arg2[%c0_70, %c0_71, %c0_72] : memref<9x16x256xf32, #tpu.memory_space<vmem>>, vector<1x16x256xf32>
    %110 = vector.shape_cast %109 : vector<1x16x256xf32> to vector<16x256xf32>
    %111 = arith.mulf %108, %110 : vector<16x256xf32>
    %112 = arith.truncf %111 : vector<16x256xf32> to vector<16x256xbf16>
    %c16_i32_73 = arith.constant 16 : i32
    %113 = tpu.dynamic_rotate %106 by %c16_i32_73 dim 1 : vector<16x256xf32>, i32 -> vector<16x256xf32>
    %c1_74 = arith.constant 1 : index
    %c0_75 = arith.constant 0 : index
    %c0_76 = arith.constant 0 : index
    %114 = vector.load %arg2[%c1_74, %c0_75, %c0_76] : memref<9x16x256xf32, #tpu.memory_space<vmem>>, vector<1x16x256xf32>
    %115 = vector.shape_cast %114 : vector<1x16x256xf32> to vector<16x256xf32>
    %116 = arith.mulf %113, %115 : vector<16x256xf32>
    %117 = arith.truncf %116 : vector<16x256xf32> to vector<16x256xbf16>
    %c15_i32_77 = arith.constant 15 : i32
    %118 = tpu.dynamic_rotate %106 by %c15_i32_77 dim 1 : vector<16x256xf32>, i32 -> vector<16x256xf32>
    %c2_78 = arith.constant 2 : index
    %c0_79 = arith.constant 0 : index
    %c0_80 = arith.constant 0 : index
    %119 = vector.load %arg2[%c2_78, %c0_79, %c0_80] : memref<9x16x256xf32, #tpu.memory_space<vmem>>, vector<1x16x256xf32>
    %120 = vector.shape_cast %119 : vector<1x16x256xf32> to vector<16x256xf32>
    %121 = arith.mulf %118, %120 : vector<16x256xf32>
    %122 = arith.truncf %121 : vector<16x256xf32> to vector<16x256xbf16>
    %c1_i32_81 = arith.constant 1 : i32
    %123 = tpu.dynamic_rotate %106 by %c1_i32_81 dim 1 : vector<16x256xf32>, i32 -> vector<16x256xf32>
    %c3_82 = arith.constant 3 : index
    %c0_83 = arith.constant 0 : index
    %c0_84 = arith.constant 0 : index
    %124 = vector.load %arg2[%c3_82, %c0_83, %c0_84] : memref<9x16x256xf32, #tpu.memory_space<vmem>>, vector<1x16x256xf32>
    %125 = vector.shape_cast %124 : vector<1x16x256xf32> to vector<16x256xf32>
    %126 = arith.mulf %123, %125 : vector<16x256xf32>
    %127 = arith.truncf %126 : vector<16x256xf32> to vector<16x256xbf16>
    %c4_85 = arith.constant 4 : index
    %c0_86 = arith.constant 0 : index
    %c0_87 = arith.constant 0 : index
    %128 = vector.load %arg2[%c4_85, %c0_86, %c0_87] : memref<9x16x256xf32, #tpu.memory_space<vmem>>, vector<1x16x256xf32>
    %129 = vector.shape_cast %128 : vector<1x16x256xf32> to vector<16x256xf32>
    %130 = arith.mulf %106, %129 : vector<16x256xf32>
    %131 = arith.truncf %130 : vector<16x256xf32> to vector<16x256xbf16>
    %c255_i32_88 = arith.constant 255 : i32
    %132 = tpu.dynamic_rotate %106 by %c255_i32_88 dim 1 : vector<16x256xf32>, i32 -> vector<16x256xf32>
    %c5_89 = arith.constant 5 : index
    %c0_90 = arith.constant 0 : index
    %c0_91 = arith.constant 0 : index
    %133 = vector.load %arg2[%c5_89, %c0_90, %c0_91] : memref<9x16x256xf32, #tpu.memory_space<vmem>>, vector<1x16x256xf32>
    %134 = vector.shape_cast %133 : vector<1x16x256xf32> to vector<16x256xf32>
    %135 = arith.mulf %132, %134 : vector<16x256xf32>
    %136 = arith.truncf %135 : vector<16x256xf32> to vector<16x256xbf16>
    %c241_i32_92 = arith.constant 241 : i32
    %137 = tpu.dynamic_rotate %106 by %c241_i32_92 dim 1 : vector<16x256xf32>, i32 -> vector<16x256xf32>
    %c6_93 = arith.constant 6 : index
    %c0_94 = arith.constant 0 : index
    %c0_95 = arith.constant 0 : index
    %138 = vector.load %arg2[%c6_93, %c0_94, %c0_95] : memref<9x16x256xf32, #tpu.memory_space<vmem>>, vector<1x16x256xf32>
    %139 = vector.shape_cast %138 : vector<1x16x256xf32> to vector<16x256xf32>
    %140 = arith.mulf %137, %139 : vector<16x256xf32>
    %141 = arith.truncf %140 : vector<16x256xf32> to vector<16x256xbf16>
    %c240_i32_96 = arith.constant 240 : i32
    %142 = tpu.dynamic_rotate %106 by %c240_i32_96 dim 1 : vector<16x256xf32>, i32 -> vector<16x256xf32>
    %c7_97 = arith.constant 7 : index
    %c0_98 = arith.constant 0 : index
    %c0_99 = arith.constant 0 : index
    %143 = vector.load %arg2[%c7_97, %c0_98, %c0_99] : memref<9x16x256xf32, #tpu.memory_space<vmem>>, vector<1x16x256xf32>
    %144 = vector.shape_cast %143 : vector<1x16x256xf32> to vector<16x256xf32>
    %145 = arith.mulf %142, %144 : vector<16x256xf32>
    %146 = arith.truncf %145 : vector<16x256xf32> to vector<16x256xbf16>
    %c239_i32_100 = arith.constant 239 : i32
    %147 = tpu.dynamic_rotate %106 by %c239_i32_100 dim 1 : vector<16x256xf32>, i32 -> vector<16x256xf32>
    %c8_101 = arith.constant 8 : index
    %c0_102 = arith.constant 0 : index
    %c0_103 = arith.constant 0 : index
    %148 = vector.load %arg2[%c8_101, %c0_102, %c0_103] : memref<9x16x256xf32, #tpu.memory_space<vmem>>, vector<1x16x256xf32>
    %149 = vector.shape_cast %148 : vector<1x16x256xf32> to vector<16x256xf32>
    %150 = arith.mulf %147, %149 : vector<16x256xf32>
    %151 = arith.truncf %150 : vector<16x256xf32> to vector<16x256xbf16>
    %152 = tpu.concatenate %112, %117, %122, %127, %131, %136, %141, %146, %151 in 0 : vector<16x256xbf16>, vector<16x256xbf16>, vector<16x256xbf16>, vector<16x256xbf16>, vector<16x256xbf16>, vector<16x256xbf16>, vector<16x256xbf16>, vector<16x256xbf16>, vector<16x256xbf16> -> vector<144x256xbf16>
    %c0_104 = arith.constant 0 : index
    %c0_105 = arith.constant 0 : index
    %153 = vector.load %arg7[%c0_104, %c0_105] : memref<16x144xbf16, #tpu.memory_space<vmem>>, vector<16x144xbf16>
    %cst_106 = arith.constant dense<0.000000e+00> : vector<16x256xf32>
    %154 = tpu.matmul %153, %152, %cst_106 {dimension_numbers = #tpu.dot_dimension_numbers<[1], [0], [0], [1], [0, 0, 1, 1], [], []>} : vector<16x144xbf16>, vector<144x256xbf16>, vector<16x256xf32> -> vector<16x256xf32>
    %155 = vector.broadcast %107 : vector<16x1xf32> to vector<16x256xf32>
    %156 = arith.addf %154, %155 : vector<16x256xf32>
    %cst_107 = arith.constant 0.00999999977 : f32
    %157 = vector.broadcast %cst_107 : f32 to vector<16x256xf32>
    %158 = arith.mulf %157, %156 : vector<16x256xf32>
    %159 = arith.maximumf %156, %158 : vector<16x256xf32>
    %c0_108 = arith.constant 0 : index
    %c0_109 = arith.constant 0 : index
    %160 = vector.load %arg10[%c0_108, %c0_109] : memref<4x1xf32, #tpu.memory_space<vmem>>, vector<4x1xf32>
    %c17_i32_110 = arith.constant 17 : i32
    %161 = tpu.dynamic_rotate %159 by %c17_i32_110 dim 1 : vector<16x256xf32>, i32 -> vector<16x256xf32>
    %c0_111 = arith.constant 0 : index
    %c0_112 = arith.constant 0 : index
    %c0_113 = arith.constant 0 : index
    %162 = vector.load %arg2[%c0_111, %c0_112, %c0_113] : memref<9x16x256xf32, #tpu.memory_space<vmem>>, vector<1x16x256xf32>
    %163 = vector.shape_cast %162 : vector<1x16x256xf32> to vector<16x256xf32>
    %164 = arith.mulf %161, %163 : vector<16x256xf32>
    %165 = arith.truncf %164 : vector<16x256xf32> to vector<16x256xbf16>
    %c16_i32_114 = arith.constant 16 : i32
    %166 = tpu.dynamic_rotate %159 by %c16_i32_114 dim 1 : vector<16x256xf32>, i32 -> vector<16x256xf32>
    %c1_115 = arith.constant 1 : index
    %c0_116 = arith.constant 0 : index
    %c0_117 = arith.constant 0 : index
    %167 = vector.load %arg2[%c1_115, %c0_116, %c0_117] : memref<9x16x256xf32, #tpu.memory_space<vmem>>, vector<1x16x256xf32>
    %168 = vector.shape_cast %167 : vector<1x16x256xf32> to vector<16x256xf32>
    %169 = arith.mulf %166, %168 : vector<16x256xf32>
    %170 = arith.truncf %169 : vector<16x256xf32> to vector<16x256xbf16>
    %c15_i32_118 = arith.constant 15 : i32
    %171 = tpu.dynamic_rotate %159 by %c15_i32_118 dim 1 : vector<16x256xf32>, i32 -> vector<16x256xf32>
    %c2_119 = arith.constant 2 : index
    %c0_120 = arith.constant 0 : index
    %c0_121 = arith.constant 0 : index
    %172 = vector.load %arg2[%c2_119, %c0_120, %c0_121] : memref<9x16x256xf32, #tpu.memory_space<vmem>>, vector<1x16x256xf32>
    %173 = vector.shape_cast %172 : vector<1x16x256xf32> to vector<16x256xf32>
    %174 = arith.mulf %171, %173 : vector<16x256xf32>
    %175 = arith.truncf %174 : vector<16x256xf32> to vector<16x256xbf16>
    %c1_i32_122 = arith.constant 1 : i32
    %176 = tpu.dynamic_rotate %159 by %c1_i32_122 dim 1 : vector<16x256xf32>, i32 -> vector<16x256xf32>
    %c3_123 = arith.constant 3 : index
    %c0_124 = arith.constant 0 : index
    %c0_125 = arith.constant 0 : index
    %177 = vector.load %arg2[%c3_123, %c0_124, %c0_125] : memref<9x16x256xf32, #tpu.memory_space<vmem>>, vector<1x16x256xf32>
    %178 = vector.shape_cast %177 : vector<1x16x256xf32> to vector<16x256xf32>
    %179 = arith.mulf %176, %178 : vector<16x256xf32>
    %180 = arith.truncf %179 : vector<16x256xf32> to vector<16x256xbf16>
    %c4_126 = arith.constant 4 : index
    %c0_127 = arith.constant 0 : index
    %c0_128 = arith.constant 0 : index
    %181 = vector.load %arg2[%c4_126, %c0_127, %c0_128] : memref<9x16x256xf32, #tpu.memory_space<vmem>>, vector<1x16x256xf32>
    %182 = vector.shape_cast %181 : vector<1x16x256xf32> to vector<16x256xf32>
    %183 = arith.mulf %159, %182 : vector<16x256xf32>
    %184 = arith.truncf %183 : vector<16x256xf32> to vector<16x256xbf16>
    %c255_i32_129 = arith.constant 255 : i32
    %185 = tpu.dynamic_rotate %159 by %c255_i32_129 dim 1 : vector<16x256xf32>, i32 -> vector<16x256xf32>
    %c5_130 = arith.constant 5 : index
    %c0_131 = arith.constant 0 : index
    %c0_132 = arith.constant 0 : index
    %186 = vector.load %arg2[%c5_130, %c0_131, %c0_132] : memref<9x16x256xf32, #tpu.memory_space<vmem>>, vector<1x16x256xf32>
    %187 = vector.shape_cast %186 : vector<1x16x256xf32> to vector<16x256xf32>
    %188 = arith.mulf %185, %187 : vector<16x256xf32>
    %189 = arith.truncf %188 : vector<16x256xf32> to vector<16x256xbf16>
    %c241_i32_133 = arith.constant 241 : i32
    %190 = tpu.dynamic_rotate %159 by %c241_i32_133 dim 1 : vector<16x256xf32>, i32 -> vector<16x256xf32>
    %c6_134 = arith.constant 6 : index
    %c0_135 = arith.constant 0 : index
    %c0_136 = arith.constant 0 : index
    %191 = vector.load %arg2[%c6_134, %c0_135, %c0_136] : memref<9x16x256xf32, #tpu.memory_space<vmem>>, vector<1x16x256xf32>
    %192 = vector.shape_cast %191 : vector<1x16x256xf32> to vector<16x256xf32>
    %193 = arith.mulf %190, %192 : vector<16x256xf32>
    %194 = arith.truncf %193 : vector<16x256xf32> to vector<16x256xbf16>
    %c240_i32_137 = arith.constant 240 : i32
    %195 = tpu.dynamic_rotate %159 by %c240_i32_137 dim 1 : vector<16x256xf32>, i32 -> vector<16x256xf32>
    %c7_138 = arith.constant 7 : index
    %c0_139 = arith.constant 0 : index
    %c0_140 = arith.constant 0 : index
    %196 = vector.load %arg2[%c7_138, %c0_139, %c0_140] : memref<9x16x256xf32, #tpu.memory_space<vmem>>, vector<1x16x256xf32>
    %197 = vector.shape_cast %196 : vector<1x16x256xf32> to vector<16x256xf32>
    %198 = arith.mulf %195, %197 : vector<16x256xf32>
    %199 = arith.truncf %198 : vector<16x256xf32> to vector<16x256xbf16>
    %c239_i32_141 = arith.constant 239 : i32
    %200 = tpu.dynamic_rotate %159 by %c239_i32_141 dim 1 : vector<16x256xf32>, i32 -> vector<16x256xf32>
    %c8_142 = arith.constant 8 : index
    %c0_143 = arith.constant 0 : index
    %c0_144 = arith.constant 0 : index
    %201 = vector.load %arg2[%c8_142, %c0_143, %c0_144] : memref<9x16x256xf32, #tpu.memory_space<vmem>>, vector<1x16x256xf32>
    %202 = vector.shape_cast %201 : vector<1x16x256xf32> to vector<16x256xf32>
    %203 = arith.mulf %200, %202 : vector<16x256xf32>
    %204 = arith.truncf %203 : vector<16x256xf32> to vector<16x256xbf16>
    %205 = tpu.concatenate %165, %170, %175, %180, %184, %189, %194, %199, %204 in 0 : vector<16x256xbf16>, vector<16x256xbf16>, vector<16x256xbf16>, vector<16x256xbf16>, vector<16x256xbf16>, vector<16x256xbf16>, vector<16x256xbf16>, vector<16x256xbf16>, vector<16x256xbf16> -> vector<144x256xbf16>
    %c0_145 = arith.constant 0 : index
    %c0_146 = arith.constant 0 : index
    %206 = vector.load %arg9[%c0_145, %c0_146] : memref<4x144xbf16, #tpu.memory_space<vmem>>, vector<4x144xbf16>
    %cst_147 = arith.constant dense<0.000000e+00> : vector<4x256xf32>
    %207 = tpu.matmul %206, %205, %cst_147 {dimension_numbers = #tpu.dot_dimension_numbers<[1], [0], [0], [1], [0, 0, 1, 1], [], []>} : vector<4x144xbf16>, vector<144x256xbf16>, vector<4x256xf32> -> vector<4x256xf32>
    %208 = vector.broadcast %160 : vector<4x1xf32> to vector<4x256xf32>
    %209 = arith.addf %207, %208 : vector<4x256xf32>
    %cst_148 = arith.constant 0.000000e+00 : f32
    %210 = vector.broadcast %cst_148 : f32 to vector<4x256xf32>
    %211 = arith.subf %210, %209 : vector<4x256xf32>
    %212 = math.exp %211 : vector<4x256xf32>
    %cst_149 = arith.constant 1.000000e+00 : f32
    %213 = vector.broadcast %cst_149 : f32 to vector<4x256xf32>
    %214 = arith.addf %213, %212 : vector<4x256xf32>
    %cst_150 = arith.constant 1.000000e+00 : f32
    %215 = vector.broadcast %cst_150 : f32 to vector<4x256xf32>
    %216 = arith.divf %215, %214 : vector<4x256xf32>
    %c0_151 = arith.constant 0 : index
    %c0_152 = arith.constant 0 : index
    %c0_153 = arith.constant 0 : index
    %217 = vector.load %arg11[%c0_151, %c0_152, %c0_153] : memref<1x4x256xf32, #tpu.memory_space<vmem>>, vector<1x4x256xf32>
    %218 = vector.shape_cast %217 : vector<1x4x256xf32> to vector<4x256xf32>
    %219 = vector.shape_cast %216 : vector<4x256xf32> to vector<1x4x256xf32>
    tpu.vector_store %arg11[%c0_151, %c0_152, %c0_153], %219 {strides = array<i32>} : memref<1x4x256xf32, #tpu.memory_space<vmem>>, vector<1x4x256xf32>,
    return
  }
  func.func @transform_0(%arg0: i32) -> (i32, i32, i32) {
    %c0_i32 = arith.constant 0 : i32
    %c0_i32_0 = arith.constant 0 : i32
    %c0_i32_1 = arith.constant 0 : i32
    return %arg0, %c0_i32, %c0_i32_0 : i32, i32, i32
  }
  func.func @transform_1(%arg0: i32) -> (i32, i32, i32) {
    %c0_i32 = arith.constant 0 : i32
    %c0_i32_0 = arith.constant 0 : i32
    %c0_i32_1 = arith.constant 0 : i32
    %c0_i32_2 = arith.constant 0 : i32
    return %c0_i32, %c0_i32_0, %c0_i32_1 : i32, i32, i32
  }
  func.func @transform_2(%arg0: i32) -> (i32, i32) {
    %c0_i32 = arith.constant 0 : i32
    %c0_i32_0 = arith.constant 0 : i32
    %c0_i32_1 = arith.constant 0 : i32
    return %c0_i32, %c0_i32_0 : i32, i32
  }
  func.func @transform_3(%arg0: i32) -> (i32, i32) {
    %c0_i32 = arith.constant 0 : i32
    %c0_i32_0 = arith.constant 0 : i32
    %c0_i32_1 = arith.constant 0 : i32
    return %c0_i32, %c0_i32_0 : i32, i32
  }
  func.func @transform_4(%arg0: i32) -> (i32, i32) {
    %c0_i32 = arith.constant 0 : i32
    %c0_i32_0 = arith.constant 0 : i32
    %c0_i32_1 = arith.constant 0 : i32
    return %c0_i32, %c0_i32_0 : i32, i32
  }
  func.func @transform_5(%arg0: i32) -> (i32, i32) {
    %c0_i32 = arith.constant 0 : i32
    %c0_i32_0 = arith.constant 0 : i32
    %c0_i32_1 = arith.constant 0 : i32
    return %c0_i32, %c0_i32_0 : i32, i32
  }
  func.func @transform_6(%arg0: i32) -> (i32, i32) {
    %c0_i32 = arith.constant 0 : i32
    %c0_i32_0 = arith.constant 0 : i32
    %c0_i32_1 = arith.constant 0 : i32
    return %c0_i32, %c0_i32_0 : i32, i32
  }
  func.func @transform_7(%arg0: i32) -> (i32, i32) {
    %c0_i32 = arith.constant 0 : i32
    %c0_i32_0 = arith.constant 0 : i32
    %c0_i32_1 = arith.constant 0 : i32
    return %c0_i32, %c0_i32_0 : i32, i32
  }
  func.func @transform_8(%arg0: i32) -> (i32, i32) {
    %c0_i32 = arith.constant 0 : i32
    %c0_i32_0 = arith.constant 0 : i32
    %c0_i32_1 = arith.constant 0 : i32
    return %c0_i32, %c0_i32_0 : i32, i32
  }
  func.func @transform_9(%arg0: i32) -> (i32, i32) {
    %c0_i32 = arith.constant 0 : i32
    %c0_i32_0 = arith.constant 0 : i32
    %c0_i32_1 = arith.constant 0 : i32
    return %c0_i32, %c0_i32_0 : i32, i32
  }
  func.func @transform_10(%arg0: i32) -> (i32, i32, i32) {
    %c0_i32 = arith.constant 0 : i32
    %c0_i32_0 = arith.constant 0 : i32
    %c0_i32_1 = arith.constant 0 : i32
    return %arg0, %c0_i32, %c0_i32_0 : i32, i32, i32
  }
}

</mosaic_0001>

<llo_original>
// kernel: squeeze.1
$region0: #{squeeze.1}
  %s0 = inlined_call_operand.vmem [shape: bf16[16,3,3], index: 0, kind: input, shape index: {}]
  %s1 = inlined_call_operand.vmem [shape: bf16[16,9], index: 1, kind: output, shape index: {}]
  $region1: #{squeeze.1} parent=0
    #allocation0 [shape = 'u8[8192]{0}', space=vmem, size = 0x2000, scoped, tag = 'scoped mem for output reshape']
    #allocation1 [shape = 'u8[12288]{0}', space=vmem, size = 0x3000, scoped, tag = 'scoped mem for input reshape']
    %s3 = smul.u32 2, 2
    %s4 = sshll.u32 1, %s3
    %s5 = ssub.s32 %s4, 1
    %s6 = smul.addr 2, 2
    %s7 = scalar_lea.vmem %s0, %s6
    %s8 = sshrl.u32 %s5, 1
    %s9 = sor.u32 %s5, %s8
    %s10 = sand.u32 %s9, 85
    %s11 = sshrl.u32 %s10, 1
    %s12 = sor.u32 %s10, %s11
    %s13 = sand.u32 51, %s12
    %s14 = sshrl.u32 %s13, 2
    %s15 = sor.u32 %s13, %s14
    %s16 = sand.u32 15, %s15
    %v17 = vld [vmem:[%s7] sm:%s16]
    %v18 = vunpack.c.l.bf16 %v17
    %v19 = vunpack.c.h.bf16 %v17
    %s20 = scalar_lea.vmem [#allocation1], 16
    %21 = vst [vmem:[%s20] sm:%s5] %v18
    %s22 = scalar_lea.vmem %s0, 2
    %s23 = sshrl.u32 %s5, 1
    %s24 = sor.u32 %s5, %s23
    %s25 = sand.u32 %s24, 85
    %s26 = sshrl.u32 %s25, 1
    %s27 = sor.u32 %s25, %s26
    %s28 = sand.u32 51, %s27
    %s29 = sshrl.u32 %s28, 2
    %s30 = sor.u32 %s28, %s29
    %s31 = sand.u32 15, %s30
    %v32 = vld [vmem:[%s22] sm:%s31]
    %v33 = vunpack.c.l.bf16 %v32
    %v34 = vunpack.c.h.bf16 %v32
    %s35 = scalar_lea.vmem [#allocation1], 8
    %36 = vst [vmem:[%s35] sm:%s5] %v33
    %s37 = sshrl.u32 %s5, 1
    %s38 = sor.u32 %s5, %s37
    %s39 = sand.u32 %s38, 85
    %s40 = sshrl.u32 %s39, 1
    %s41 = sor.u32 %s39, %s40
    %s42 = sand.u32 51, %s41
    %s43 = sshrl.u32 %s42, 2
    %s44 = sor.u32 %s42, %s43
    %s45 = sand.u32 15, %s44
    %v46 = vld [vmem:[%s0] sm:%s45]
    %v47 = vunpack.c.l.bf16 %v46
    %v48 = vunpack.c.h.bf16 %v46
    %49 = vst [vmem:[#allocation1] sm:%s5] %v47
    %v50 = vld [vmem:[#allocation1] sm:$0x7]
    %vm51 = vcmask 130048
    %52 = vst.msk [vmem:[#allocation0] sm:$0x7] %vm51, %v50
    %s53 = scalar_lea.vmem [#allocation1], 8
    %v54 = vld [vmem:[%s53] sm:$0x7]
    %vm55 = vcmask 130048
    %s56 = scalar_lea.vmem [#allocation0], 3
    %57 = vst.msk [vmem:[%s56] sm:$0x7] %vm55, %v54
    %s58 = scalar_lea.vmem [#allocation1], 16
    %v59 = vld [vmem:[%s58] sm:$0x7]
    %vm60 = vcmask 130048
    %s61 = scalar_lea.vmem [#allocation0], 6
    %62 = vst.msk [vmem:[%s61] sm:$0x7] %vm60, %v59
    %s64 = smul.u32 4, 2
    %s65 = sshll.u32 1, %s64
    %s66 = ssub.s32 %s65, 1
    %s67 = sshrl.u32 %s64, 1
    %v68 = vld [vmem:[#allocation0] sm:%s66]
    %v69 = vpack.c.bf16 0.0, %v68
    %s70 = sshll.u32 1, %s67
    %s71 = ssub.s32 %s70, 1
    %72 = vst [vmem:[%s1] sm:%s71] %v69
    %s73 = scalar_lea.vmem [#allocation0], 8
    %v74 = vld [vmem:[%s73] sm:%s66]
    %v75 = vpack.c.bf16 0.0, %v74
    %s76 = sshll.u32 1, %s67
    %s77 = ssub.s32 %s76, 1
    %s78 = scalar_lea.vmem %s1, 4
    %79 = vst [vmem:[%s78] sm:%s77] %v75

// kernel: conv4deep3_forward.1
$region0: #{conv4deep3_forward.1}
  #allocation0 [shape = 'u32[]', space=smem, size = 0x4, offset = 0x4, fixed_abs, tag = 'smem constant byte address 0x4 - core index']
  #allocation1 [shape = 'u32[144,128]{1,0:T(1,128)}', space=vmem, size = 0x12000, scoped, tag = 'internal scratch']
  %s0 = inlined_call_operand.vmem [shape: f32[2,16,256], index: 0, kind: input, shape index: {}]
  %s1 = inlined_call_operand.vmem [shape: f32[9,16,256], index: 1, kind: input, shape index: {}]
  %s2 = inlined_call_operand.vmem [shape: f32[16,256], index: 2, kind: input, shape index: {}]
  %s3 = inlined_call_operand.vmem [shape: bf16[16,144], index: 3, kind: input, shape index: {}]
  %s4 = inlined_call_operand.vmem [shape: bf16[16,144], index: 4, kind: input, shape index: {}]
  %s5 = inlined_call_operand.vmem [shape: f32[16,1], index: 5, kind: input, shape index: {}]
  %s6 = inlined_call_operand.vmem [shape: bf16[16,144], index: 6, kind: input, shape index: {}]
  %s7 = inlined_call_operand.vmem [shape: f32[16,1], index: 7, kind: input, shape index: {}]
  %s8 = inlined_call_operand.vmem [shape: bf16[4,144], index: 8, kind: input, shape index: {}]
  %s9 = inlined_call_operand.vmem [shape: f32[4,1], index: 9, kind: input, shape index: {}]
  %s10 = inlined_call_operand.vmem [shape: f32[2,4,256], index: 10, kind: output, shape index: {}]
  %s11 = sld [smem:[#allocation0]]
  $region73: #{conv4deep3_forward.1} parent=0
    _
  %s13 = ssub.s32 1, %s11
  %s14 = scalar_select 0, %s13, %s11
  loop: start=0, step=1, limit=4
  $region2: #{conv4deep3_forward.1} parent=0 // loop_pre_header
    _
  $region3: #{conv4deep3_forward.1} parent=0 // loop_header
    %s16 = sphi 0, %s20
    %p17 = scmp.ge.s32.totalorder %s16, 4
    %s26 = sphi 0, %s28
    %s29 = sphi 0, %s26
    %s30 = sphi 0, %s29
    %s46 = sphi 0, %s30
    %s50 = sphi 0, %s50
    %s52 = sphi 0, %s50
    %s53 = sphi 0, %s52
    %s67 = sphi 0, %s53
    %s71 = sphi 0, %s71
    %s73 = sphi 0, %s71
    %s74 = sphi 0, %s73
    %s88 = sphi 0, %s74
    %s92 = sphi 0, %s92
    %s94 = sphi 0, %s92
    %s95 = sphi 0, %s94
    %s109 = sphi 0, %s95
    %s113 = sphi 0, %s113
    %s115 = sphi 0, %s113
    %s116 = sphi 0, %s115
    %s130 = sphi 0, %s116
    %s134 = sphi 0, %s134
    %s136 = sphi 0, %s134
    %s137 = sphi 0, %s136
    %s151 = sphi 0, %s137
    %s155 = sphi 0, %s155
    %s157 = sphi 0, %s155
    %s158 = sphi 0, %s157
    %s172 = sphi 0, %s158
    %s176 = sphi 0, %s176
    %s178 = sphi 0, %s176
    %s179 = sphi 0, %s178
    %s193 = sphi 0, %s179
    %s197 = sphi 0, %s197
    %s199 = sphi 0, %s197
    %s200 = sphi 0, %s199
    %s214 = sphi 0, %s200
    %s218 = sphi 0, %s218
    %s220 = sphi 0, %s218
    %s221 = sphi 0, %s220
    %s235 = sphi 0, %s221
    %s241 = sphi 0, %s243
    %s244 = sphi 0, %s241
    %s245 = sphi 0, %s244
    %s261 = sphi 0, %s245
  $region4: #{conv4deep3_forward.1} parent=0 // loop_header_branch
    %19 = sbr.rel (%p17) target = $region8
  $region5: #{conv4deep3_forward.1} parent=0 // loop_body
    %s21 = ssub.s32 %s16, 1
    %s22 = ssub.s32 %s16, 2
    %s23 = sadd.s32 %s16, 1
    %s24 = ssub.s32 %s16, %s23
    %p25 = scmp.eq.s32.totalorder %s24, 0
    %s27 = sadd.s32 %s26, 1
    %s28 = scalar_select %p25, %s26, %s27
    %p31 = pneg %p25
    %p32 = scmp.eq.s32.totalorder %s16, 1
    %p33 = por %p31, %p32
    %p34 = scmp.ne.s32.totalorder %s26, %s29
    %p35 = scmp.eq.s32.totalorder %s16, 0
    %p36 = por %p34, %p35
    %p37 = scmp.ne.s32.totalorder %s26, %s29
    %p38 = scmp.eq.s32.totalorder %s21, 1
    %p39 = por %p37, %p38
    %p40 = scmp.ne.s32.totalorder %s29, %s30
    %p41 = scmp.eq.s32.totalorder %s21, 0
    %p42 = por %p40, %p41
    %p43 = scmp.ne.s32.totalorder %s29, %s30
    %p44 = scmp.eq.s32.totalorder %s22, 1
    %p45 = por %p43, %p44
    %p47 = scmp.ne.s32.totalorder %s30, %s46
    %p48 = scmp.eq.s32.totalorder %s22, 0
    %p49 = por %p47, %p48
    %s51 = sadd.s32 %s50, 1
    %p54 = scmp.eq.s32.totalorder %s16, 1
    %p55 = scmp.ne.s32.totalorder %s50, %s52
    %p56 = scmp.eq.s32.totalorder %s16, 0
    %p57 = por %p55, %p56
    %p58 = scmp.ne.s32.totalorder %s50, %s52
    %p59 = scmp.eq.s32.totalorder %s21, 1
    %p60 = por %p58, %p59
    %p61 = scmp.ne.s32.totalorder %s52, %s53
    %p62 = scmp.eq.s32.totalorder %s21, 0
    %p63 = por %p61, %p62
    %p64 = scmp.ne.s32.totalorder %s52, %s53
    %p65 = scmp.eq.s32.totalorder %s22, 1
    %p66 = por %p64, %p65
    %p68 = scmp.ne.s32.totalorder %s53, %s67
    %p69 = scmp.eq.s32.totalorder %s22, 0
    %p70 = por %p68, %p69
    %s72 = sadd.s32 %s71, 1
    %p75 = scmp.eq.s32.totalorder %s16, 1
    %p76 = scmp.ne.s32.totalorder %s71, %s73
    %p77 = scmp.eq.s32.totalorder %s16, 0
    %p78 = por %p76, %p77
    %p79 = scmp.ne.s32.totalorder %s71, %s73
    %p80 = scmp.eq.s32.totalorder %s21, 1
    %p81 = por %p79, %p80
    %p82 = scmp.ne.s32.totalorder %s73, %s74
    %p83 = scmp.eq.s32.totalorder %s21, 0
    %p84 = por %p82, %p83
    %p85 = scmp.ne.s32.totalorder %s73, %s74
    %p86 = scmp.eq.s32.totalorder %s22, 1
    %p87 = por %p85, %p86
    %p89 = scmp.ne.s32.totalorder %s74, %s88
    %p90 = scmp.eq.s32.totalorder %s22, 0
    %p91 = por %p89, %p90
    %s93 = sadd.s32 %s92, 1
    %p96 = scmp.eq.s32.totalorder %s16, 1
    %p97 = scmp.ne.s32.totalorder %s92, %s94
    %p98 = scmp.eq.s32.totalorder %s16, 0
    %p99 = por %p97, %p98
    %p100 = scmp.ne.s32.totalorder %s92, %s94
    %p101 = scmp.eq.s32.totalorder %s21, 1
    %p102 = por %p100, %p101
    %p103 = scmp.ne.s32.totalorder %s94, %s95
    %p104 = scmp.eq.s32.totalorder %s21, 0
    %p105 = por %p103, %p104
    %p106 = scmp.ne.s32.totalorder %s94, %s95
    %p107 = scmp.eq.s32.totalorder %s22, 1
    %p108 = por %p106, %p107
    %p110 = scmp.ne.s32.totalorder %s95, %s109
    %p111 = scmp.eq.s32.totalorder %s22, 0
    %p112 = por %p110, %p111
    %s114 = sadd.s32 %s113, 1
    %p117 = scmp.eq.s32.totalorder %s16, 1
    %p118 = scmp.ne.s32.totalorder %s113, %s115
    %p119 = scmp.eq.s32.totalorder %s16, 0
    %p120 = por %p118, %p119
    %p121 = scmp.ne.s32.totalorder %s113, %s115
    %p122 = scmp.eq.s32.totalorder %s21, 1
    %p123 = por %p121, %p122
    %p124 = scmp.ne.s32.totalorder %s115, %s116
    %p125 = scmp.eq.s32.totalorder %s21, 0
    %p126 = por %p124, %p125
    %p127 = scmp.ne.s32.totalorder %s115, %s116
    %p128 = scmp.eq.s32.totalorder %s22, 1
    %p129 = por %p127, %p128
    %p131 = scmp.ne.s32.totalorder %s116, %s130
    %p132 = scmp.eq.s32.totalorder %s22, 0
    %p133 = por %p131, %p132
    %s135 = sadd.s32 %s134, 1
    %p138 = scmp.eq.s32.totalorder %s16, 1
    %p139 = scmp.ne.s32.totalorder %s134, %s136
    %p140 = scmp.eq.s32.totalorder %s16, 0
    %p141 = por %p139, %p140
    %p142 = scmp.ne.s32.totalorder %s134, %s136
    %p143 = scmp.eq.s32.totalorder %s21, 1
    %p144 = por %p142, %p143
    %p145 = scmp.ne.s32.totalorder %s136, %s137
    %p146 = scmp.eq.s32.totalorder %s21, 0
    %p147 = por %p145, %p146
    %p148 = scmp.ne.s32.totalorder %s136, %s137
    %p149 = scmp.eq.s32.totalorder %s22, 1
    %p150 = por %p148, %p149
    %p152 = scmp.ne.s32.totalorder %s137, %s151
    %p153 = scmp.eq.s32.totalorder %s22, 0
    %p154 = por %p152, %p153
    %s156 = sadd.s32 %s155, 1
    %p159 = scmp.eq.s32.totalorder %s16, 1
    %p160 = scmp.ne.s32.totalorder %s155, %s157
    %p161 = scmp.eq.s32.totalorder %s16, 0
    %p162 = por %p160, %p161
    %p163 = scmp.ne.s32.totalorder %s155, %s157
    %p164 = scmp.eq.s32.totalorder %s21, 1
    %p165 = por %p163, %p164
    %p166 = scmp.ne.s32.totalorder %s157, %s158
    %p167 = scmp.eq.s32.totalorder %s21, 0
    %p168 = por %p166, %p167
    %p169 = scmp.ne.s32.totalorder %s157, %s158
    %p170 = scmp.eq.s32.totalorder %s22, 1
    %p171 = por %p169, %p170
    %p173 = scmp.ne.s32.totalorder %s158, %s172
    %p174 = scmp.eq.s32.totalorder %s22, 0
    %p175 = por %p173, %p174
    %s177 = sadd.s32 %s176, 1
    %p180 = scmp.eq.s32.totalorder %s16, 1
    %p181 = scmp.ne.s32.totalorder %s176, %s178
    %p182 = scmp.eq.s32.totalorder %s16, 0
    %p183 = por %p181, %p182
    %p184 = scmp.ne.s32.totalorder %s176, %s178
    %p185 = scmp.eq.s32.totalorder %s21, 1
    %p186 = por %p184, %p185
    %p187 = scmp.ne.s32.totalorder %s178, %s179
    %p188 = scmp.eq.s32.totalorder %s21, 0
    %p189 = por %p187, %p188
    %p190 = scmp.ne.s32.totalorder %s178, %s179
    %p191 = scmp.eq.s32.totalorder %s22, 1
    %p192 = por %p190, %p191
    %p194 = scmp.ne.s32.totalorder %s179, %s193
    %p195 = scmp.eq.s32.totalorder %s22, 0
    %p196 = por %p194, %p195
    %s198 = sadd.s32 %s197, 1
    %p201 = scmp.eq.s32.totalorder %s16, 1
    %p202 = scmp.ne.s32.totalorder %s197, %s199
    %p203 = scmp.eq.s32.totalorder %s16, 0
    %p204 = por %p202, %p203
    %p205 = scmp.ne.s32.totalorder %s197, %s199
    %p206 = scmp.eq.s32.totalorder %s21, 1
    %p207 = por %p205, %p206
    %p208 = scmp.ne.s32.totalorder %s199, %s200
    %p209 = scmp.eq.s32.totalorder %s21, 0
    %p210 = por %p208, %p209
    %p211 = scmp.ne.s32.totalorder %s199, %s200
    %p212 = scmp.eq.s32.totalorder %s22, 1
    %p213 = por %p211, %p212
    %p215 = scmp.ne.s32.totalorder %s200, %s214
    %p216 = scmp.eq.s32.totalorder %s22, 0
    %p217 = por %p215, %p216
    %s219 = sadd.s32 %s218, 1
    %p222 = scmp.eq.s32.totalorder %s16, 1
    %p223 = scmp.ne.s32.totalorder %s218, %s220
    %p224 = scmp.eq.s32.totalorder %s16, 0
    %p225 = por %p223, %p224
    %p226 = scmp.ne.s32.totalorder %s218, %s220
    %p227 = scmp.eq.s32.totalorder %s21, 1
    %p228 = por %p226, %p227
    %p229 = scmp.ne.s32.totalorder %s220, %s221
    %p230 = scmp.eq.s32.totalorder %s21, 0
    %p231 = por %p229, %p230
    %p232 = scmp.ne.s32.totalorder %s220, %s221
    %p233 = scmp.eq.s32.totalorder %s22, 1
    %p234 = por %p232, %p233
    %p236 = scmp.ne.s32.totalorder %s221, %s235
    %p237 = scmp.eq.s32.totalorder %s22, 0
    %p238 = por %p236, %p237
    %s239 = ssub.s32 %s16, %s23
    %p240 = scmp.eq.s32.totalorder %s239, 0
    %s242 = sadd.s32 %s241, 1
    %s243 = scalar_select %p240, %s241, %s242
    %p246 = pneg %p240
    %p247 = scmp.eq.s32.totalorder %s16, 1
    %p248 = por %p246, %p247
    %p249 = scmp.ne.s32.totalorder %s241, %s244
    %p250 = scmp.eq.s32.totalorder %s16, 0
    %p251 = por %p249, %p250
    %p252 = scmp.ne.s32.totalorder %s241, %s244
    %p253 = scmp.eq.s32.totalorder %s21, 1
    %p254 = por %p252, %p253
    %p255 = scmp.ne.s32.totalorder %s244, %s245
    %p256 = scmp.eq.s32.totalorder %s21, 0
    %p257 = por %p255, %p256
    %p258 = scmp.ne.s32.totalorder %s244, %s245
    %p259 = scmp.eq.s32.totalorder %s22, 1
    %p260 = por %p258, %p259
    %p262 = scmp.ne.s32.totalorder %s245, %s261
    %p263 = scmp.eq.s32.totalorder %s22, 0
    %p264 = por %p262, %p263
    %p265 = scmp.le.s32.totalorder 1, %s16
    %p266 = scmp.lt.s32.totalorder %s16, 3
    %p267 = pnand %p265, %p266
    %p268 = pneg %p267
    // Predicated region
    $region9: #{conv4deep3_forward.1} parent=5 // pred_check
      _
    $region10: #{conv4deep3_forward.1} parent=5 // pred_check_branch
      %270 = sbr.rel (%p267) target = $region12
    $region11: #{conv4deep3_forward.1} parent=5 // pred_region
      %s271 = ssub.s32 %s16, 1
      // Predicated region
      $region13: #{conv4deep3_forward.1} parent=11 // pred_check
        %p272 = pneg %p63
      $region14: #{conv4deep3_forward.1} parent=11 // pred_check_branch
        %274 = sbr.rel (%p272) target = $region16
      $region15: #{conv4deep3_forward.1} parent=11 // pred_region
        _
      $region16: #{conv4deep3_forward.1} parent=11 // pred_fallthru
        _
      // Predicated region
      $region17: #{conv4deep3_forward.1} parent=11 // pred_check
        %p275 = pneg %p84
      $region18: #{conv4deep3_forward.1} parent=11 // pred_check_branch
        %277 = sbr.rel (%p275) target = $region20
      $region19: #{conv4deep3_forward.1} parent=11 // pred_region
        _
      $region20: #{conv4deep3_forward.1} parent=11 // pred_fallthru
        _
      // Predicated region
      $region21: #{conv4deep3_forward.1} parent=11 // pred_check
        %p278 = pneg %p105
      $region22: #{conv4deep3_forward.1} parent=11 // pred_check_branch
        %280 = sbr.rel (%p278) target = $region24
      $region23: #{conv4deep3_forward.1} parent=11 // pred_region
        _
      $region24: #{conv4deep3_forward.1} parent=11 // pred_fallthru
        _
      // Predicated region
      $region25: #{conv4deep3_forward.1} parent=11 // pred_check
        %p281 = pneg %p126
      $region26: #{conv4deep3_forward.1} parent=11 // pred_check_branch
        %283 = sbr.rel (%p281) target = $region28
      $region27: #{conv4deep3_forward.1} parent=11 // pred_region
        _
      $region28: #{conv4deep3_forward.1} parent=11 // pred_fallthru
        _
      // Predicated region
      $region29: #{conv4deep3_forward.1} parent=11 // pred_check
        %p284 = pneg %p147
      $region30: #{conv4deep3_forward.1} parent=11 // pred_check_branch
        %286 = sbr.rel (%p284) target = $region32
      $region31: #{conv4deep3_forward.1} parent=11 // pred_region
        _
      $region32: #{conv4deep3_forward.1} parent=11 // pred_fallthru
        _
      // Predicated region
      $region33: #{conv4deep3_forward.1} parent=11 // pred_check
        %p287 = pneg %p168
      $region34: #{conv4deep3_forward.1} parent=11 // pred_check_branch
        %289 = sbr.rel (%p287) target = $region36
      $region35: #{conv4deep3_forward.1} parent=11 // pred_region
        _
      $region36: #{conv4deep3_forward.1} parent=11 // pred_fallthru
        _
      // Predicated region
      $region37: #{conv4deep3_forward.1} parent=11 // pred_check
        %p290 = pneg %p189
      $region38: #{conv4deep3_forward.1} parent=11 // pred_check_branch
        %292 = sbr.rel (%p290) target = $region40
      $region39: #{conv4deep3_forward.1} parent=11 // pred_region
        _
      $region40: #{conv4deep3_forward.1} parent=11 // pred_fallthru
        _
      // Predicated region
      $region41: #{conv4deep3_forward.1} parent=11 // pred_check
        %p293 = pneg %p210
      $region42: #{conv4deep3_forward.1} parent=11 // pred_check_branch
        %295 = sbr.rel (%p293) target = $region44
      $region43: #{conv4deep3_forward.1} parent=11 // pred_region
        _
      $region44: #{conv4deep3_forward.1} parent=11 // pred_fallthru
        _
      // Predicated region
      $region45: #{conv4deep3_forward.1} parent=11 // pred_check
        %p296 = pneg %p231
      $region46: #{conv4deep3_forward.1} parent=11 // pred_check_branch
        %298 = sbr.rel (%p296) target = $region48
      $region47: #{conv4deep3_forward.1} parent=11 // pred_region
        _
      $region48: #{conv4deep3_forward.1} parent=11 // pred_fallthru
        _
    $region12: #{conv4deep3_forward.1} parent=5 // pred_fallthru
      _
    %p299 = scmp.lt.s32.totalorder %s16, 2
    // Predicated region
    $region49: #{conv4deep3_forward.1} parent=5 // pred_check
      %p300 = pneg %p299
    $region50: #{conv4deep3_forward.1} parent=5 // pred_check_branch
      %302 = sbr.rel (%p300) target = $region52
    $region51: #{conv4deep3_forward.1} parent=5 // pred_region
      // Predicated region
      $region53: #{conv4deep3_forward.1} parent=51 // pred_check
        %p303 = pneg %p36
      $region54: #{conv4deep3_forward.1} parent=51 // pred_check_branch
        %305 = sbr.rel (%p303) target = $region56
      $region55: #{conv4deep3_forward.1} parent=51 // pred_region
        %p306 = scmp.lt.s32.totalorder %s16, 1
        %s307 = scalar_select %p306, %s16, 1
        %s308 = smul.addr %s307, 4
        %s309 = smul.addr %s308, 8
        %s310 = scalar_lea.vmem %s0, %s309
      $region56: #{conv4deep3_forward.1} parent=51 // pred_fallthru
        _
    $region52: #{conv4deep3_forward.1} parent=5 // pred_fallthru
      _
    %p311 = scmp.le.s32.totalorder 1, %s16
    %p312 = scmp.lt.s32.totalorder %s16, 3
    %p313 = pnand %p311, %p312
    %p314 = pneg %p313
    // Predicated region
    $region57: #{conv4deep3_forward.1} parent=5 // pred_check
      _
    $region58: #{conv4deep3_forward.1} parent=5 // pred_check_branch
      %316 = sbr.rel (%p313) target = $region60
    $region59: #{conv4deep3_forward.1} parent=5 // pred_region
      %s317 = ssub.s32 %s16, 1
      %p318 = scmp.lt.s32.totalorder %s21, 1
      %s319 = scalar_select %p318, %s21, 1
      %s320 = smul.addr %s319, 4
      %s321 = smul.addr %s320, 8
      %s322 = scalar_lea.vmem %s0, %s321
      %p323 = pneg %p42
      %p324 = pneg %p39
      %p325 = pneg %p63
      %p326 = pneg %p60
      %p327 = pneg %p84
      %p328 = pneg %p81
      %p329 = pneg %p105
      %p330 = pneg %p102
      %p331 = pneg %p126
      %p332 = pneg %p123
      %p333 = pneg %p147
      %p334 = pneg %p144
      %p335 = pneg %p168
      %p336 = pneg %p165
      %p337 = pneg %p189
      %p338 = pneg %p186
      %p339 = pneg %p210
      %p340 = pneg %p207
      %p341 = pneg %p231
      %p342 = pneg %p228
      %p343 = pneg %p257
      %p344 = pneg %p254
      %p345 = scmp.lt.s32.totalorder %s21, 1
      %s346 = scalar_select %p345, %s21, 1
      %s347 = smul.addr %s346, 2
      %s348 = smul.addr %s347, 4
      %s349 = scalar_lea.vmem %s10, %s348
      %p350 = scmp.lt.s32.totalorder %s21, 1
      %s351 = scalar_select %p350, %s21, 1
      %s352 = smul.addr %s351, 4
      %s353 = smul.addr %s352, 8
      %s354 = scalar_lea.vmem %s0, %s353
      %p355 = scmp.lt.s32.totalorder %s21, 1
      %s356 = scalar_select %p355, %s21, 1
      %s357 = smul.addr %s356, 2
      %s358 = smul.addr %s357, 4
      %s359 = scalar_lea.vmem %s10, %s358
      %v361 = vld [vmem:[%s354] sm:$0xff]
      %v362 = vld [vmem:[%s354 + $0x8] sm:$0xff]
      %v363 = vld [vmem:[%s354 + $0x10] sm:$0xff]
      %v364 = vld [vmem:[%s354 + $0x18] sm:$0xff]
      %v365 = vld [vmem:[%s2] sm:$0xff]
      %v366 = vld [vmem:[%s2 + $0x8] sm:$0xff]
      %v367 = vld [vmem:[%s2 + $0x10] sm:$0xff]
      %v368 = vld [vmem:[%s2 + $0x18] sm:$0xff]
      %369 = vrot.lane.b32.xlu0 %v361, 17
      %v370 = vpop.permute.xlu0 %369
      %371 = vrot.lane.b32.xlu0 %v363, 17
      %v372 = vpop.permute.xlu0 %371
      %373 = vrot.lane.b32.xlu0 %v362, 17
      %v374 = vpop.permute.xlu0 %373
      %375 = vrot.lane.b32.xlu0 %v364, 17
      %v376 = vpop.permute.xlu0 %375
      %v377 = vlaneseq
      %v378 = vand.u32 %v377, 127
      %vm379 = vcmp.lt.s32.totalorder %v378, 17
      %v380 = vsel %vm379, %v370, %v374
      %v381 = vsel %vm379, %v372, %v376
      %v382 = vsel %vm379, %v374, %v370
      %v383 = vsel %vm379, %v376, %v372
      %v384 = vld [vmem:[%s1] sm:$0xff]
      %v385 = vld [vmem:[%s1 + $0x8] sm:$0xff]
      %v386 = vld [vmem:[%s1 + $0x10] sm:$0xff]
      %v387 = vld [vmem:[%s1 + $0x18] sm:$0xff]
      %v388 = vmul.f32 %v382, %v384
      %v389 = vmul.f32 %v380, %v385
      %v390 = vmul.f32 %v383, %v386
      %v391 = vmul.f32 %v381, %v387
      %v392 = vpack.c.bf16 %v390, %v388
      %v393 = vpack.c.bf16 %v391, %v389
      %394 = vrot.lane.b32.xlu0 %v361, 16
      %v395 = vpop.permute.xlu0 %394
      %396 = vrot.lane.b32.xlu0 %v363, 16
      %v397 = vpop.permute.xlu0 %396
      %398 = vrot.lane.b32.xlu0 %v362, 16
      %v399 = vpop.permute.xlu0 %398
      %400 = vrot.lane.b32.xlu0 %v364, 16
      %v401 = vpop.permute.xlu0 %400
      %vm402 = vcmp.lt.s32.totalorder %v378, 16
      %v403 = vsel %vm402, %v395, %v399
      %v404 = vsel %vm402, %v397, %v401
      %v405 = vsel %vm402, %v399, %v395
      %v406 = vsel %vm402, %v401, %v397
      %s407 = scalar_lea.vmem %s1, 32
      %v408 = vld [vmem:[%s407] sm:$0xff]
      %v409 = vld [vmem:[%s407 + $0x8] sm:$0xff]
      %v410 = vld [vmem:[%s407 + $0x10] sm:$0xff]
      %v411 = vld [vmem:[%s407 + $0x18] sm:$0xff]
      %v412 = vmul.f32 %v405, %v408
      %v413 = vmul.f32 %v403, %v409
      %v414 = vmul.f32 %v406, %v410
      %v415 = vmul.f32 %v404, %v411
      %v416 = vpack.c.bf16 %v414, %v412
      %v417 = vpack.c.bf16 %v415, %v413
      %418 = vrot.lane.b32.xlu0 %v361, 15
      %v419 = vpop.permute.xlu0 %418
      %420 = vrot.lane.b32.xlu0 %v363, 15
      %v421 = vpop.permute.xlu0 %420
      %422 = vrot.lane.b32.xlu0 %v362, 15
      %v423 = vpop.permute.xlu0 %422
      %424 = vrot.lane.b32.xlu0 %v364, 15
      %v425 = vpop.permute.xlu0 %424
      %vm426 = vcmp.lt.s32.totalorder %v378, 15
      %v427 = vsel %vm426, %v419, %v423
      %v428 = vsel %vm426, %v421, %v425
      %v429 = vsel %vm426, %v423, %v419
      %v430 = vsel %vm426, %v425, %v421
      %s431 = scalar_lea.vmem %s1, 64
      %v432 = vld [vmem:[%s431] sm:$0xff]
      %v433 = vld [vmem:[%s431 + $0x8] sm:$0xff]
      %v434 = vld [vmem:[%s431 + $0x10] sm:$0xff]
      %v435 = vld [vmem:[%s431 + $0x18] sm:$0xff]
      %v436 = vmul.f32 %v429, %v432
      %v437 = vmul.f32 %v427, %v433
      %v438 = vmul.f32 %v430, %v434
      %v439 = vmul.f32 %v428, %v435
      %v440 = vpack.c.bf16 %v438, %v436
      %v441 = vpack.c.bf16 %v439, %v437
      %442 = vrot.lane.b32.xlu0 %v361, 1
      %v443 = vpop.permute.xlu0 %442
      %444 = vrot.lane.b32.xlu0 %v363, 1
      %v445 = vpop.permute.xlu0 %444
      %446 = vrot.lane.b32.xlu0 %v362, 1
      %v447 = vpop.permute.xlu0 %446
      %448 = vrot.lane.b32.xlu0 %v364, 1
      %v449 = vpop.permute.xlu0 %448
      %vm450 = vcmp.lt.s32.totalorder %v378, 1
      %v451 = vsel %vm450, %v443, %v447
      %v452 = vsel %vm450, %v445, %v449
      %v453 = vsel %vm450, %v447, %v443
      %v454 = vsel %vm450, %v449, %v445
      %s455 = scalar_lea.vmem %s1, 96
      %v456 = vld [vmem:[%s455] sm:$0xff]
      %v457 = vld [vmem:[%s455 + $0x8] sm:$0xff]
      %v458 = vld [vmem:[%s455 + $0x10] sm:$0xff]
      %v459 = vld [vmem:[%s455 + $0x18] sm:$0xff]
      %v460 = vmul.f32 %v453, %v456
      %v461 = vmul.f32 %v451, %v457
      %v462 = vmul.f32 %v454, %v458
      %v463 = vmul.f32 %v452, %v459
      %v464 = vpack.c.bf16 %v462, %v460
      %v465 = vpack.c.bf16 %v463, %v461
      %s466 = scalar_lea.vmem %s1, 128
      %v467 = vld [vmem:[%s466] sm:$0xff]
      %v468 = vld [vmem:[%s466 + $0x8] sm:$0xff]
      %v469 = vld [vmem:[%s466 + $0x10] sm:$0xff]
      %v470 = vld [vmem:[%s466 + $0x18] sm:$0xff]
      %v471 = vmul.f32 %v361, %v467
      %v472 = vmul.f32 %v362, %v468
      %v473 = vmul.f32 %v363, %v469
      %v474 = vmul.f32 %v364, %v470
      %v475 = vpack.c.bf16 %v473, %v471
      %v476 = vpack.c.bf16 %v474, %v472
      %477 = vrot.lane.b32.xlu0 %v361, 127
      %v478 = vpop.permute.xlu0 %477
      %479 = vrot.lane.b32.xlu0 %v363, 127
      %v480 = vpop.permute.xlu0 %479
      %481 = vrot.lane.b32.xlu0 %v362, 127
      %v482 = vpop.permute.xlu0 %481
      %483 = vrot.lane.b32.xlu0 %v364, 127
      %v484 = vpop.permute.xlu0 %483
      %vm485 = vcmp.lt.s32.totalorder %v378, 127
      %v486 = vsel %vm485, %v478, %v482
      %v487 = vsel %vm485, %v480, %v484
      %v488 = vsel %vm485, %v482, %v478
      %v489 = vsel %vm485, %v484, %v480
      %s490 = scalar_lea.vmem %s1, 160
      %v491 = vld [vmem:[%s490] sm:$0xff]
      %v492 = vld [vmem:[%s490 + $0x8] sm:$0xff]
      %v493 = vld [vmem:[%s490 + $0x10] sm:$0xff]
      %v494 = vld [vmem:[%s490 + $0x18] sm:$0xff]
      %v495 = vmul.f32 %v486, %v491
      %v496 = vmul.f32 %v488, %v492
      %v497 = vmul.f32 %v487, %v493
      %v498 = vmul.f32 %v489, %v494
      %v499 = vpack.c.bf16 %v497, %v495
      %v500 = vpack.c.bf16 %v498, %v496
      %501 = vrot.lane.b32.xlu0 %v361, 113
      %v502 = vpop.permute.xlu0 %501
      %503 = vrot.lane.b32.xlu0 %v363, 113
      %v504 = vpop.permute.xlu0 %503
      %505 = vrot.lane.b32.xlu0 %v362, 113
      %v506 = vpop.permute.xlu0 %505
      %507 = vrot.lane.b32.xlu0 %v364, 113
      %v508 = vpop.permute.xlu0 %507
      %vm509 = vcmp.lt.s32.totalorder %v378, 113
      %v510 = vsel %vm509, %v502, %v506
      %v511 = vsel %vm509, %v504, %v508
      %v512 = vsel %vm509, %v506, %v502
      %v513 = vsel %vm509, %v508, %v504
      %s514 = scalar_lea.vmem %s1, 192
      %v515 = vld [vmem:[%s514] sm:$0xff]
      %v516 = vld [vmem:[%s514 + $0x8] sm:$0xff]
      %v517 = vld [vmem:[%s514 + $0x10] sm:$0xff]
      %v518 = vld [vmem:[%s514 + $0x18] sm:$0xff]
      %v519 = vmul.f32 %v510, %v515
      %v520 = vmul.f32 %v512, %v516
      %v521 = vmul.f32 %v511, %v517
      %v522 = vmul.f32 %v513, %v518
      %v523 = vpack.c.bf16 %v521, %v519
      %v524 = vpack.c.bf16 %v522, %v520
      %525 = vrot.lane.b32.xlu0 %v361, 112
      %v526 = vpop.permute.xlu0 %525
      %527 = vrot.lane.b32.xlu0 %v363, 112
      %v528 = vpop.permute.xlu0 %527
      %529 = vrot.lane.b32.xlu0 %v362, 112
      %v530 = vpop.permute.xlu0 %529
      %531 = vrot.lane.b32.xlu0 %v364, 112
      %v532 = vpop.permute.xlu0 %531
      %vm533 = vcmp.lt.s32.totalorder %v378, 112
      %v534 = vsel %vm533, %v526, %v530
      %v535 = vsel %vm533, %v528, %v532
      %v536 = vsel %vm533, %v530, %v526
      %v537 = vsel %vm533, %v532, %v528
      %s538 = scalar_lea.vmem %s1, 224
      %v539 = vld [vmem:[%s538] sm:$0xff]
      %v540 = vld [vmem:[%s538 + $0x8] sm:$0xff]
      %v541 = vld [vmem:[%s538 + $0x10] sm:$0xff]
      %v542 = vld [vmem:[%s538 + $0x18] sm:$0xff]
      %v543 = vmul.f32 %v534, %v539
      %v544 = vmul.f32 %v536, %v540
      %v545 = vmul.f32 %v535, %v541
      %v546 = vmul.f32 %v537, %v542
      %v547 = vpack.c.bf16 %v545, %v543
      %v548 = vpack.c.bf16 %v546, %v544
      %549 = vrot.lane.b32.xlu0 %v361, 111
      %v550 = vpop.permute.xlu0 %549
      %551 = vrot.lane.b32.xlu0 %v363, 111
      %v552 = vpop.permute.xlu0 %551
      %553 = vrot.lane.b32.xlu0 %v362, 111
      %v554 = vpop.permute.xlu0 %553
      %555 = vrot.lane.b32.xlu0 %v364, 111
      %v556 = vpop.permute.xlu0 %555
      %vm557 = vcmp.lt.s32.totalorder %v378, 111
      %v558 = vsel %vm557, %v550, %v554
      %v559 = vsel %vm557, %v552, %v556
      %v560 = vsel %vm557, %v554, %v550
      %v561 = vsel %vm557, %v556, %v552
      %s562 = scalar_lea.vmem %s1, 256
      %v563 = vld [vmem:[%s562] sm:$0xff]
      %v564 = vld [vmem:[%s562 + $0x8] sm:$0xff]
      %v565 = vld [vmem:[%s562 + $0x10] sm:$0xff]
      %v566 = vld [vmem:[%s562 + $0x18] sm:$0xff]
      %v567 = vmul.f32 %v558, %v563
      %v568 = vmul.f32 %v560, %v564
      %v569 = vmul.f32 %v559, %v565
      %v570 = vmul.f32 %v561, %v566
      %v571 = vpack.c.bf16 %v569, %v567
      %v572 = vpack.c.bf16 %v570, %v568
      %v573 = vld [vmem:[%s3] sm:$0xff]
      %v574 = vld [vmem:[%s3 + $0x8] sm:$0xff]
      %v577 = vunpack.c.l.b16 %v573
      %v578 = vunpack.c.h.b16 %v573
      %v579 = vunpack.c.l.b16 %v574
      %v580 = vunpack.c.h.b16 %v574
      %v581 = vpack.c.b16 %v579, %v577
      %v582 = vpack.c.b16 %v580, %v578
      %vm584 = vcmask 130048
      %v586 = vsel %vm584, %v582, 0
      %588 = vmatprep.subr.bf16.mxu0 %v548
      %589 = vmatpush1.bf16.msra.mxu0 %v547
      %590 = vmatprep.subr.bf16.mxu0 %v524
      %591 = vmatpush1.bf16.msra.mxu0 %v523
      %592 = vmatprep.subr.bf16.mxu0 %v500
      %593 = vmatpush1.bf16.msra.mxu0 %v499
      %594 = vmatprep.subr.bf16.mxu0 %v476
      %595 = vmatpush1.bf16.msra.mxu0 %v475
      %596 = vmatprep.subr.bf16.mxu0 %v465
      %597 = vmatpush1.bf16.msra.mxu0 %v464
      %598 = vmatprep.subr.bf16.mxu0 %v441
      %599 = vmatpush1.bf16.msra.mxu0 %v440
      %600 = vmatprep.subr.bf16.mxu0 %v417
      %601 = vmatpush1.bf16.msra.mxu0 %v416
      %602 = vmatprep.subr.bf16.mxu0 %v393
      %603 = vmatpush1.bf16.msra.mxu0 %v392
      %604 = vmatprep.subr.bf16.mxu0 0
      %605 = vmatpush2.bf16.msra.mxu0 0
      %606 = vmatprep.subr.bf16.mxu0 0
      %607 = vmatpush2.bf16.msra.mxu0 0
      %608 = vmatprep.subr.bf16.mxu0 0
      %609 = vmatpush2.bf16.msra.mxu0 0
      %610 = vmatprep.subr.bf16.mxu0 0
      %611 = vmatpush2.bf16.msra.mxu0 0
      %612 = vmatprep.subr.bf16.mxu0 0
      %613 = vmatpush2.bf16.msra.mxu0 0
      %614 = vmatprep.subr.bf16.mxu0 0
      %615 = vmatpush2.bf16.msra.mxu0 0
      %616 = vmatprep.subr.bf16.mxu0 0
      %617 = vmatpush2.bf16.msra.mxu0 0
      %618 = vmatprep.subr.bf16.mxu0 %v572
      %619 = vmatpush2.bf16.msra.mxu0 %v571
      %620 = vmatprep.mubr.bf16.mxu0 %v586
      %621 = vmatmul.mubr.bf16.gmra.mxu0 %v581
      %v622 = vpop.f32.mrf.mxu0
      %v623 = vadd.f32 %v365, %v622
      %v624 = vpop.f32.mrf.mxu0
      %v625 = vadd.f32 %v366, %v624
      %v626 = vpop.f32.mrf.mxu0
      %v627 = vadd.f32 %v367, %v626
      %v628 = vpop.f32.mrf.mxu0
      %v629 = vadd.f32 %v368, %v628
      %630 = vdwg.mxu0
      %v631 = vmul.f32 %v623, 0.01
      %v632 = vmul.f32 %v625, 0.01
      %v633 = vmul.f32 %v627, 0.01
      %v634 = vmul.f32 %v629, 0.01
      %v635 = vmax.f32 %v623, %v631
      %v636 = vmax.f32 %v625, %v632
      %v637 = vmax.f32 %v627, %v633
      %v638 = vmax.f32 %v629, %v634
      %v639 = vld [vmem:[%s5] sm:$0xff]
      %v640 = vld [vmem:[%s5 + $0x8] sm:$0xff]
      %641 = vrot.lane.b32.xlu0 %v635, 17
      %v642 = vpop.permute.xlu0 %641
      %643 = vrot.lane.b32.xlu0 %v637, 17
      %v644 = vpop.permute.xlu0 %643
      %645 = vrot.lane.b32.xlu0 %v636, 17
      %v646 = vpop.permute.xlu0 %645
      %647 = vrot.lane.b32.xlu0 %v638, 17
      %v648 = vpop.permute.xlu0 %647
      %v649 = vsel %vm379, %v642, %v646
      %v650 = vsel %vm379, %v644, %v648
      %v651 = vsel %vm379, %v646, %v642
      %v652 = vsel %vm379, %v648, %v644
      %v653 = vmul.f32 %v651, %v384
      %v654 = vmul.f32 %v649, %v385
      %v655 = vmul.f32 %v652, %v386
      %v656 = vmul.f32 %v650, %v387
      %v657 = vpack.c.bf16 %v655, %v653
      %v658 = vpack.c.bf16 %v656, %v654
      %659 = vrot.lane.b32.xlu0 %v635, 16
      %v660 = vpop.permute.xlu0 %659
      %661 = vrot.lane.b32.xlu0 %v637, 16
      %v662 = vpop.permute.xlu0 %661
      %663 = vrot.lane.b32.xlu0 %v636, 16
      %v664 = vpop.permute.xlu0 %663
      %665 = vrot.lane.b32.xlu0 %v638, 16
      %v666 = vpop.permute.xlu0 %665
      %v667 = vsel %vm402, %v660, %v664
      %v668 = vsel %vm402, %v662, %v666
      %v669 = vsel %vm402, %v664, %v660
      %v670 = vsel %vm402, %v666, %v662
      %v671 = vmul.f32 %v669, %v408
      %v672 = vmul.f32 %v667, %v409
      %v673 = vmul.f32 %v670, %v410
      %v674 = vmul.f32 %v668, %v411
      %v675 = vpack.c.bf16 %v673, %v671
      %v676 = vpack.c.bf16 %v674, %v672
      %677 = vrot.lane.b32.xlu0 %v635, 15
      %v678 = vpop.permute.xlu0 %677
      %679 = vrot.lane.b32.xlu0 %v637, 15
      %v680 = vpop.permute.xlu0 %679
      %681 = vrot.lane.b32.xlu0 %v636, 15
      %v682 = vpop.permute.xlu0 %681
      %683 = vrot.lane.b32.xlu0 %v638, 15
      %v684 = vpop.permute.xlu0 %683
      %v685 = vsel %vm426, %v678, %v682
      %v686 = vsel %vm426, %v680, %v684
      %v687 = vsel %vm426, %v682, %v678
      %v688 = vsel %vm426, %v684, %v680
      %v689 = vmul.f32 %v687, %v432
      %v690 = vmul.f32 %v685, %v433
      %v691 = vmul.f32 %v688, %v434
      %v692 = vmul.f32 %v686, %v435
      %v693 = vpack.c.bf16 %v691, %v689
      %v694 = vpack.c.bf16 %v692, %v690
      %695 = vrot.lane.b32.xlu0 %v635, 1
      %v696 = vpop.permute.xlu0 %695
      %697 = vrot.lane.b32.xlu0 %v637, 1
      %v698 = vpop.permute.xlu0 %697
      %699 = vrot.lane.b32.xlu0 %v636, 1
      %v700 = vpop.permute.xlu0 %699
      %701 = vrot.lane.b32.xlu0 %v638, 1
      %v702 = vpop.permute.xlu0 %701
      %v703 = vsel %vm450, %v696, %v700
      %v704 = vsel %vm450, %v698, %v702
      %v705 = vsel %vm450, %v700, %v696
      %v706 = vsel %vm450, %v702, %v698
      %v707 = vmul.f32 %v705, %v456
      %v708 = vmul.f32 %v703, %v457
      %v709 = vmul.f32 %v706, %v458
      %v710 = vmul.f32 %v704, %v459
      %v711 = vpack.c.bf16 %v709, %v707
      %v712 = vpack.c.bf16 %v710, %v708
      %v713 = vmul.f32 %v635, %v467
      %v714 = vmul.f32 %v636, %v468
      %v715 = vmul.f32 %v637, %v469
      %v716 = vmul.f32 %v638, %v470
      %v717 = vpack.c.bf16 %v715, %v713
      %v718 = vpack.c.bf16 %v716, %v714
      %719 = vrot.lane.b32.xlu0 %v635, 127
      %v720 = vpop.permute.xlu0 %719
      %721 = vrot.lane.b32.xlu0 %v637, 127
      %v722 = vpop.permute.xlu0 %721
      %723 = vrot.lane.b32.xlu0 %v636, 127
      %v724 = vpop.permute.xlu0 %723
      %725 = vrot.lane.b32.xlu0 %v638, 127
      %v726 = vpop.permute.xlu0 %725
      %v727 = vsel %vm485, %v720, %v724
      %v728 = vsel %vm485, %v722, %v726
      %v729 = vsel %vm485, %v724, %v720
      %v730 = vsel %vm485, %v726, %v722
      %v731 = vmul.f32 %v727, %v491
      %v732 = vmul.f32 %v729, %v492
      %v733 = vmul.f32 %v728, %v493
      %v734 = vmul.f32 %v730, %v494
      %v735 = vpack.c.bf16 %v733, %v731
      %v736 = vpack.c.bf16 %v734, %v732
      %737 = vrot.lane.b32.xlu0 %v635, 113
      %v738 = vpop.permute.xlu0 %737
      %739 = vrot.lane.b32.xlu0 %v637, 113
      %v740 = vpop.permute.xlu0 %739
      %741 = vrot.lane.b32.xlu0 %v636, 113
      %v742 = vpop.permute.xlu0 %741
      %743 = vrot.lane.b32.xlu0 %v638, 113
      %v744 = vpop.permute.xlu0 %743
      %v745 = vsel %vm509, %v738, %v742
      %v746 = vsel %vm509, %v740, %v744
      %v747 = vsel %vm509, %v742, %v738
      %v748 = vsel %vm509, %v744, %v740
      %v749 = vmul.f32 %v745, %v515
      %v750 = vmul.f32 %v747, %v516
      %v751 = vmul.f32 %v746, %v517
      %v752 = vmul.f32 %v748, %v518
      %v753 = vpack.c.bf16 %v751, %v749
      %v754 = vpack.c.bf16 %v752, %v750
      %755 = vrot.lane.b32.xlu0 %v635, 112
      %v756 = vpop.permute.xlu0 %755
      %757 = vrot.lane.b32.xlu0 %v637, 112
      %v758 = vpop.permute.xlu0 %757
      %759 = vrot.lane.b32.xlu0 %v636, 112
      %v760 = vpop.permute.xlu0 %759
      %761 = vrot.lane.b32.xlu0 %v638, 112
      %v762 = vpop.permute.xlu0 %761
      %v763 = vsel %vm533, %v756, %v760
      %v764 = vsel %vm533, %v758, %v762
      %v765 = vsel %vm533, %v760, %v756
      %v766 = vsel %vm533, %v762, %v758
      %v767 = vmul.f32 %v763, %v539
      %v768 = vmul.f32 %v765, %v540
      %v769 = vmul.f32 %v764, %v541
      %v770 = vmul.f32 %v766, %v542
      %v771 = vpack.c.bf16 %v769, %v767
      %v772 = vpack.c.bf16 %v770, %v768
      %773 = vrot.lane.b32.xlu0 %v635, 111
      %v774 = vpop.permute.xlu0 %773
      %775 = vrot.lane.b32.xlu0 %v637, 111
      %v776 = vpop.permute.xlu0 %775
      %777 = vrot.lane.b32.xlu0 %v636, 111
      %v778 = vpop.permute.xlu0 %777
      %779 = vrot.lane.b32.xlu0 %v638, 111
      %v780 = vpop.permute.xlu0 %779
      %v781 = vsel %vm557, %v774, %v778
      %v782 = vsel %vm557, %v776, %v780
      %v783 = vsel %vm557, %v778, %v774
      %v784 = vsel %vm557, %v780, %v776
      %v785 = vmul.f32 %v781, %v563
      %v786 = vmul.f32 %v783, %v564
      %v787 = vmul.f32 %v782, %v565
      %v788 = vmul.f32 %v784, %v566
      %v789 = vpack.c.bf16 %v787, %v785
      %v790 = vpack.c.bf16 %v788, %v786
      %v791 = vld [vmem:[%s4] sm:$0xff]
      %v792 = vld [vmem:[%s4 + $0x8] sm:$0xff]
      %794 = vset.pattern.permute.xlu0 0
      %795 = vperm.xlu0 %794, %v639
      %v796 = vpop.permute.xlu0 %795
      %799 = vset.pattern.permute.xlu0 0
      %800 = vperm.xlu0 %799, %v640
      %v801 = vpop.permute.xlu0 %800
      %v805 = vunpack.c.l.b16 %v791
      %v806 = vunpack.c.h.b16 %v791
      %v807 = vunpack.c.l.b16 %v792
      %v808 = vunpack.c.h.b16 %v792
      %v809 = vpack.c.b16 %v807, %v805
      %v810 = vpack.c.b16 %v808, %v806
      %v813 = vsel %vm584, %v810, 0
      %815 = vmatprep.subr.bf16.mxu0 %v772
      %816 = vmatpush1.bf16.msra.mxu0 %v771
      %817 = vmatprep.subr.bf16.mxu0 %v754
      %818 = vmatpush1.bf16.msra.mxu0 %v753
      %819 = vmatprep.subr.bf16.mxu0 %v736
      %820 = vmatpush1.bf16.msra.mxu0 %v735
      %821 = vmatprep.subr.bf16.mxu0 %v718
      %822 = vmatpush1.bf16.msra.mxu0 %v717
      %823 = vmatprep.subr.bf16.mxu0 %v712
      %824 = vmatpush1.bf16.msra.mxu0 %v711
      %825 = vmatprep.subr.bf16.mxu0 %v694
      %826 = vmatpush1.bf16.msra.mxu0 %v693
      %827 = vmatprep.subr.bf16.mxu0 %v676
      %828 = vmatpush1.bf16.msra.mxu0 %v675
      %829 = vmatprep.subr.bf16.mxu0 %v658
      %830 = vmatpush1.bf16.msra.mxu0 %v657
      %831 = vmatprep.subr.bf16.mxu0 0
      %832 = vmatpush2.bf16.msra.mxu0 0
      %833 = vmatprep.subr.bf16.mxu0 0
      %834 = vmatpush2.bf16.msra.mxu0 0
      %835 = vmatprep.subr.bf16.mxu0 0
      %836 = vmatpush2.bf16.msra.mxu0 0
      %837 = vmatprep.subr.bf16.mxu0 0
      %838 = vmatpush2.bf16.msra.mxu0 0
      %839 = vmatprep.subr.bf16.mxu0 0
      %840 = vmatpush2.bf16.msra.mxu0 0
      %841 = vmatprep.subr.bf16.mxu0 0
      %842 = vmatpush2.bf16.msra.mxu0 0
      %843 = vmatprep.subr.bf16.mxu0 0
      %844 = vmatpush2.bf16.msra.mxu0 0
      %845 = vmatprep.subr.bf16.mxu0 %v790
      %846 = vmatpush2.bf16.msra.mxu0 %v789
      %847 = vmatprep.mubr.bf16.mxu0 %v813
      %848 = vmatmul.mubr.bf16.gmra.mxu0 %v809
      %v849 = vpop.f32.mrf.mxu0
      %v850 = vadd.f32 %v796, %v849
      %v851 = vpop.f32.mrf.mxu0
      %v852 = vadd.f32 %v796, %v851
      %v853 = vpop.f32.mrf.mxu0
      %v854 = vadd.f32 %v801, %v853
      %v855 = vpop.f32.mrf.mxu0
      %v856 = vadd.f32 %v801, %v855
      %857 = vdwg.mxu0
      %v858 = vmul.f32 %v850, 0.01
      %v859 = vmul.f32 %v852, 0.01
      %v860 = vmul.f32 %v854, 0.01
      %v861 = vmul.f32 %v856, 0.01
      %v862 = vmax.f32 %v850, %v858
      %v863 = vmax.f32 %v852, %v859
      %v864 = vmax.f32 %v854, %v860
      %v865 = vmax.f32 %v856, %v861
      %v866 = vld [vmem:[%s7] sm:$0xff]
      %v867 = vld [vmem:[%s7 + $0x8] sm:$0xff]
      %868 = vrot.lane.b32.xlu0 %v862, 17
      %v869 = vpop.permute.xlu0 %868
      %870 = vrot.lane.b32.xlu0 %v864, 17
      %v871 = vpop.permute.xlu0 %870
      %872 = vrot.lane.b32.xlu0 %v863, 17
      %v873 = vpop.permute.xlu0 %872
      %874 = vrot.lane.b32.xlu0 %v865, 17
      %v875 = vpop.permute.xlu0 %874
      %v876 = vsel %vm379, %v869, %v873
      %v877 = vsel %vm379, %v871, %v875
      %v878 = vsel %vm379, %v873, %v869
      %v879 = vsel %vm379, %v875, %v871
      %v880 = vmul.f32 %v878, %v384
      %v881 = vmul.f32 %v876, %v385
      %v882 = vmul.f32 %v879, %v386
      %v883 = vmul.f32 %v877, %v387
      %v884 = vpack.c.bf16 %v882, %v880
      %v885 = vpack.c.bf16 %v883, %v881
      %886 = vrot.lane.b32.xlu0 %v862, 16
      %v887 = vpop.permute.xlu0 %886
      %888 = vrot.lane.b32.xlu0 %v864, 16
      %v889 = vpop.permute.xlu0 %888
      %890 = vrot.lane.b32.xlu0 %v863, 16
      %v891 = vpop.permute.xlu0 %890
      %892 = vrot.lane.b32.xlu0 %v865, 16
      %v893 = vpop.permute.xlu0 %892
      %v894 = vsel %vm402, %v887, %v891
      %v895 = vsel %vm402, %v889, %v893
      %v896 = vsel %vm402, %v891, %v887
      %v897 = vsel %vm402, %v893, %v889
      %v898 = vmul.f32 %v896, %v408
      %v899 = vmul.f32 %v894, %v409
      %v900 = vmul.f32 %v897, %v410
      %v901 = vmul.f32 %v895, %v411
      %v902 = vpack.c.bf16 %v900, %v898
      %v903 = vpack.c.bf16 %v901, %v899
      %904 = vrot.lane.b32.xlu0 %v862, 15
      %v905 = vpop.permute.xlu0 %904
      %906 = vrot.lane.b32.xlu0 %v864, 15
      %v907 = vpop.permute.xlu0 %906
      %908 = vrot.lane.b32.xlu0 %v863, 15
      %v909 = vpop.permute.xlu0 %908
      %910 = vrot.lane.b32.xlu0 %v865, 15
      %v911 = vpop.permute.xlu0 %910
      %v912 = vsel %vm426, %v905, %v909
      %v913 = vsel %vm426, %v907, %v911
      %v914 = vsel %vm426, %v909, %v905
      %v915 = vsel %vm426, %v911, %v907
      %v916 = vmul.f32 %v914, %v432
      %v917 = vmul.f32 %v912, %v433
      %v918 = vmul.f32 %v915, %v434
      %v919 = vmul.f32 %v913, %v435
      %v920 = vpack.c.bf16 %v918, %v916
      %v921 = vpack.c.bf16 %v919, %v917
      %922 = vrot.lane.b32.xlu0 %v862, 1
      %v923 = vpop.permute.xlu0 %922
      %924 = vrot.lane.b32.xlu0 %v864, 1
      %v925 = vpop.permute.xlu0 %924
      %926 = vrot.lane.b32.xlu0 %v863, 1
      %v927 = vpop.permute.xlu0 %926
      %928 = vrot.lane.b32.xlu0 %v865, 1
      %v929 = vpop.permute.xlu0 %928
      %v930 = vsel %vm450, %v923, %v927
      %v931 = vsel %vm450, %v925, %v929
      %v932 = vsel %vm450, %v927, %v923
      %v933 = vsel %vm450, %v929, %v925
      %v934 = vmul.f32 %v932, %v456
      %v935 = vmul.f32 %v930, %v457
      %v936 = vmul.f32 %v933, %v458
      %v937 = vmul.f32 %v931, %v459
      %v938 = vpack.c.bf16 %v936, %v934
      %v939 = vpack.c.bf16 %v937, %v935
      %v940 = vmul.f32 %v862, %v467
      %v941 = vmul.f32 %v863, %v468
      %v942 = vmul.f32 %v864, %v469
      %v943 = vmul.f32 %v865, %v470
      %v944 = vpack.c.bf16 %v942, %v940
      %v945 = vpack.c.bf16 %v943, %v941
      %946 = vrot.lane.b32.xlu0 %v862, 127
      %v947 = vpop.permute.xlu0 %946
      %948 = vrot.lane.b32.xlu0 %v864, 127
      %v949 = vpop.permute.xlu0 %948
      %950 = vrot.lane.b32.xlu0 %v863, 127
      %v951 = vpop.permute.xlu0 %950
      %952 = vrot.lane.b32.xlu0 %v865, 127
      %v953 = vpop.permute.xlu0 %952
      %v954 = vsel %vm485, %v947, %v951
      %v955 = vsel %vm485, %v949, %v953
      %v956 = vsel %vm485, %v951, %v947
      %v957 = vsel %vm485, %v953, %v949
      %v958 = vmul.f32 %v954, %v491
      %v959 = vmul.f32 %v956, %v492
      %v960 = vmul.f32 %v955, %v493
      %v961 = vmul.f32 %v957, %v494
      %v962 = vpack.c.bf16 %v960, %v958
      %v963 = vpack.c.bf16 %v961, %v959
      %964 = vrot.lane.b32.xlu0 %v862, 113
      %v965 = vpop.permute.xlu0 %964
      %966 = vrot.lane.b32.xlu0 %v864, 113
      %v967 = vpop.permute.xlu0 %966
      %968 = vrot.lane.b32.xlu0 %v863, 113
      %v969 = vpop.permute.xlu0 %968
      %970 = vrot.lane.b32.xlu0 %v865, 113
      %v971 = vpop.permute.xlu0 %970
      %v972 = vsel %vm509, %v965, %v969
      %v973 = vsel %vm509, %v967, %v971
      %v974 = vsel %vm509, %v969, %v965
      %v975 = vsel %vm509, %v971, %v967
      %v976 = vmul.f32 %v972, %v515
      %v977 = vmul.f32 %v974, %v516
      %v978 = vmul.f32 %v973, %v517
      %v979 = vmul.f32 %v975, %v518
      %v980 = vpack.c.bf16 %v978, %v976
      %v981 = vpack.c.bf16 %v979, %v977
      %982 = vrot.lane.b32.xlu0 %v862, 112
      %v983 = vpop.permute.xlu0 %982
      %984 = vrot.lane.b32.xlu0 %v864, 112
      %v985 = vpop.permute.xlu0 %984
      %986 = vrot.lane.b32.xlu0 %v863, 112
      %v987 = vpop.permute.xlu0 %986
      %988 = vrot.lane.b32.xlu0 %v865, 112
      %v989 = vpop.permute.xlu0 %988
      %v990 = vsel %vm533, %v983, %v987
      %v991 = vsel %vm533, %v985, %v989
      %v992 = vsel %vm533, %v987, %v983
      %v993 = vsel %vm533, %v989, %v985
      %v994 = vmul.f32 %v990, %v539
      %v995 = vmul.f32 %v992, %v540
      %v996 = vmul.f32 %v991, %v541
      %v997 = vmul.f32 %v993, %v542
      %v998 = vpack.c.bf16 %v996, %v994
      %v999 = vpack.c.bf16 %v997, %v995
      %1000 = vrot.lane.b32.xlu0 %v862, 111
      %v1001 = vpop.permute.xlu0 %1000
      %1002 = vrot.lane.b32.xlu0 %v864, 111
      %v1003 = vpop.permute.xlu0 %1002
      %1004 = vrot.lane.b32.xlu0 %v863, 111
      %v1005 = vpop.permute.xlu0 %1004
      %1006 = vrot.lane.b32.xlu0 %v865, 111
      %v1007 = vpop.permute.xlu0 %1006
      %v1008 = vsel %vm557, %v1001, %v1005
      %v1009 = vsel %vm557, %v1003, %v1007
      %v1010 = vsel %vm557, %v1005, %v1001
      %v1011 = vsel %vm557, %v1007, %v1003
      %v1012 = vmul.f32 %v1008, %v563
      %v1013 = vmul.f32 %v1010, %v564
      %v1014 = vmul.f32 %v1009, %v565
      %v1015 = vmul.f32 %v1011, %v566
      %v1016 = vpack.c.bf16 %v1014, %v1012
      %v1017 = vpack.c.bf16 %v1015, %v1013
      %v1018 = vld [vmem:[%s6] sm:$0xff]
      %v1019 = vld [vmem:[%s6 + $0x8] sm:$0xff]
      %1021 = vset.pattern.permute.xlu0 0
      %1022 = vperm.xlu0 %1021, %v866
      %v1023 = vpop.permute.xlu0 %1022
      %1026 = vset.pattern.permute.xlu0 0
      %1027 = vperm.xlu0 %1026, %v867
      %v1028 = vpop.permute.xlu0 %1027
      %v1032 = vunpack.c.l.b16 %v1018
      %v1033 = vunpack.c.h.b16 %v1018
      %v1034 = vunpack.c.l.b16 %v1019
      %v1035 = vunpack.c.h.b16 %v1019
      %v1036 = vpack.c.b16 %v1034, %v1032
      %v1037 = vpack.c.b16 %v1035, %v1033
      %v1040 = vsel %vm584, %v1037, 0
      %1042 = vmatprep.subr.bf16.mxu0 %v999
      %1043 = vmatpush1.bf16.msra.mxu0 %v998
      %1044 = vmatprep.subr.bf16.mxu0 %v981
      %1045 = vmatpush1.bf16.msra.mxu0 %v980
      %1046 = vmatprep.subr.bf16.mxu0 %v963
      %1047 = vmatpush1.bf16.msra.mxu0 %v962
      %1048 = vmatprep.subr.bf16.mxu0 %v945
      %1049 = vmatpush1.bf16.msra.mxu0 %v944
      %1050 = vmatprep.subr.bf16.mxu0 %v939
      %1051 = vmatpush1.bf16.msra.mxu0 %v938
      %1052 = vmatprep.subr.bf16.mxu0 %v921
      %1053 = vmatpush1.bf16.msra.mxu0 %v920
      %1054 = vmatprep.subr.bf16.mxu0 %v903
      %1055 = vmatpush1.bf16.msra.mxu0 %v902
      %1056 = vmatprep.subr.bf16.mxu0 %v885
      %1057 = vmatpush1.bf16.msra.mxu0 %v884
      %1058 = vmatprep.subr.bf16.mxu0 0
      %1059 = vmatpush2.bf16.msra.mxu0 0
      %1060 = vmatprep.subr.bf16.mxu0 0
      %1061 = vmatpush2.bf16.msra.mxu0 0
      %1062 = vmatprep.subr.bf16.mxu0 0
      %1063 = vmatpush2.bf16.msra.mxu0 0
      %1064 = vmatprep.subr.bf16.mxu0 0
      %1065 = vmatpush2.bf16.msra.mxu0 0
      %1066 = vmatprep.subr.bf16.mxu0 0
      %1067 = vmatpush2.bf16.msra.mxu0 0
      %1068 = vmatprep.subr.bf16.mxu0 0
      %1069 = vmatpush2.bf16.msra.mxu0 0
      %1070 = vmatprep.subr.bf16.mxu0 0
      %1071 = vmatpush2.bf16.msra.mxu0 0
      %1072 = vmatprep.subr.bf16.mxu0 %v1017
      %1073 = vmatpush2.bf16.msra.mxu0 %v1016
      %1074 = vmatprep.mubr.bf16.mxu0 %v1040
      %1075 = vmatmul.mubr.bf16.gmra.mxu0 %v1036
      %v1076 = vpop.f32.mrf.mxu0
      %v1077 = vadd.f32 %v1023, %v1076
      %v1078 = vpop.f32.mrf.mxu0
      %v1079 = vadd.f32 %v1023, %v1078
      %v1080 = vpop.f32.mrf.mxu0
      %v1081 = vadd.f32 %v1028, %v1080
      %v1082 = vpop.f32.mrf.mxu0
      %v1083 = vadd.f32 %v1028, %v1082
      %1084 = vdwg.mxu0
      %v1085 = vmul.f32 %v1077, 0.01
      %v1086 = vmul.f32 %v1079, 0.01
      %v1087 = vmul.f32 %v1081, 0.01
      %v1088 = vmul.f32 %v1083, 0.01
      %v1089 = vmax.f32 %v1077, %v1085
      %v1090 = vmax.f32 %v1079, %v1086
      %v1091 = vmax.f32 %v1081, %v1087
      %v1092 = vmax.f32 %v1083, %v1088
      %v1093 = vld [vmem:[%s9] sm:$0xf]
      %1094 = vrot.lane.b32.xlu0 %v1089, 17
      %v1095 = vpop.permute.xlu0 %1094
      %1096 = vrot.lane.b32.xlu0 %v1091, 17
      %v1097 = vpop.permute.xlu0 %1096
      %1098 = vrot.lane.b32.xlu0 %v1090, 17
      %v1099 = vpop.permute.xlu0 %1098
      %1100 = vrot.lane.b32.xlu0 %v1092, 17
      %v1101 = vpop.permute.xlu0 %1100
      %v1102 = vsel %vm379, %v1095, %v1099
      %v1103 = vsel %vm379, %v1097, %v1101
      %v1104 = vsel %vm379, %v1099, %v1095
      %v1105 = vsel %vm379, %v1101, %v1097
      %v1106 = vmul.f32 %v1104, %v384
      %v1107 = vmul.f32 %v1102, %v385
      %v1108 = vmul.f32 %v1105, %v386
      %v1109 = vmul.f32 %v1103, %v387
      %v1110 = vpack.c.bf16 %v1108, %v1106
      %v1111 = vpack.c.bf16 %v1109, %v1107
      %1112 = vrot.lane.b32.xlu0 %v1089, 16
      %v1113 = vpop.permute.xlu0 %1112
      %1114 = vrot.lane.b32.xlu0 %v1091, 16
      %v1115 = vpop.permute.xlu0 %1114
      %1116 = vrot.lane.b32.xlu0 %v1090, 16
      %v1117 = vpop.permute.xlu0 %1116
      %1118 = vrot.lane.b32.xlu0 %v1092, 16
      %v1119 = vpop.permute.xlu0 %1118
      %v1120 = vsel %vm402, %v1113, %v1117
      %v1121 = vsel %vm402, %v1115, %v1119
      %v1122 = vsel %vm402, %v1117, %v1113
      %v1123 = vsel %vm402, %v1119, %v1115
      %v1124 = vmul.f32 %v1122, %v408
      %v1125 = vmul.f32 %v1120, %v409
      %v1126 = vmul.f32 %v1123, %v410
      %v1127 = vmul.f32 %v1121, %v411
      %v1128 = vpack.c.bf16 %v1126, %v1124
      %v1129 = vpack.c.bf16 %v1127, %v1125
      %1130 = vrot.lane.b32.xlu0 %v1089, 15
      %v1131 = vpop.permute.xlu0 %1130
      %1132 = vrot.lane.b32.xlu0 %v1091, 15
      %v1133 = vpop.permute.xlu0 %1132
      %1134 = vrot.lane.b32.xlu0 %v1090, 15
      %v1135 = vpop.permute.xlu0 %1134
      %1136 = vrot.lane.b32.xlu0 %v1092, 15
      %v1137 = vpop.permute.xlu0 %1136
      %v1138 = vsel %vm426, %v1131, %v1135
      %v1139 = vsel %vm426, %v1133, %v1137
      %v1140 = vsel %vm426, %v1135, %v1131
      %v1141 = vsel %vm426, %v1137, %v1133
      %v1142 = vmul.f32 %v1140, %v432
      %v1143 = vmul.f32 %v1138, %v433
      %v1144 = vmul.f32 %v1141, %v434
      %v1145 = vmul.f32 %v1139, %v435
      %v1146 = vpack.c.bf16 %v1144, %v1142
      %v1147 = vpack.c.bf16 %v1145, %v1143
      %1148 = vrot.lane.b32.xlu0 %v1089, 1
      %v1149 = vpop.permute.xlu0 %1148
      %1150 = vrot.lane.b32.xlu0 %v1091, 1
      %v1151 = vpop.permute.xlu0 %1150
      %1152 = vrot.lane.b32.xlu0 %v1090, 1
      %v1153 = vpop.permute.xlu0 %1152
      %1154 = vrot.lane.b32.xlu0 %v1092, 1
      %v1155 = vpop.permute.xlu0 %1154
      %v1156 = vsel %vm450, %v1149, %v1153
      %v1157 = vsel %vm450, %v1151, %v1155
      %v1158 = vsel %vm450, %v1153, %v1149
      %v1159 = vsel %vm450, %v1155, %v1151
      %v1160 = vmul.f32 %v1158, %v456
      %v1161 = vmul.f32 %v1156, %v457
      %v1162 = vmul.f32 %v1159, %v458
      %v1163 = vmul.f32 %v1157, %v459
      %v1164 = vpack.c.bf16 %v1162, %v1160
      %v1165 = vpack.c.bf16 %v1163, %v1161
      %v1166 = vmul.f32 %v1089, %v467
      %v1167 = vmul.f32 %v1090, %v468
      %v1168 = vmul.f32 %v1091, %v469
      %v1169 = vmul.f32 %v1092, %v470
      %v1170 = vpack.c.bf16 %v1168, %v1166
      %v1171 = vpack.c.bf16 %v1169, %v1167
      %1172 = vrot.lane.b32.xlu0 %v1089, 127
      %v1173 = vpop.permute.xlu0 %1172
      %1174 = vrot.lane.b32.xlu0 %v1091, 127
      %v1175 = vpop.permute.xlu0 %1174
      %1176 = vrot.lane.b32.xlu0 %v1090, 127
      %v1177 = vpop.permute.xlu0 %1176
      %1178 = vrot.lane.b32.xlu0 %v1092, 127
      %v1179 = vpop.permute.xlu0 %1178
      %v1180 = vsel %vm485, %v1173, %v1177
      %v1181 = vsel %vm485, %v1175, %v1179
      %v1182 = vsel %vm485, %v1177, %v1173
      %v1183 = vsel %vm485, %v1179, %v1175
      %v1184 = vmul.f32 %v1180, %v491
      %v1185 = vmul.f32 %v1182, %v492
      %v1186 = vmul.f32 %v1181, %v493
      %v1187 = vmul.f32 %v1183, %v494
      %v1188 = vpack.c.bf16 %v1186, %v1184
      %v1189 = vpack.c.bf16 %v1187, %v1185
      %1190 = vrot.lane.b32.xlu0 %v1089, 113
      %v1191 = vpop.permute.xlu0 %1190
      %1192 = vrot.lane.b32.xlu0 %v1091, 113
      %v1193 = vpop.permute.xlu0 %1192
      %1194 = vrot.lane.b32.xlu0 %v1090, 113
      %v1195 = vpop.permute.xlu0 %1194
      %1196 = vrot.lane.b32.xlu0 %v1092, 113
      %v1197 = vpop.permute.xlu0 %1196
      %v1198 = vsel %vm509, %v1191, %v1195
      %v1199 = vsel %vm509, %v1193, %v1197
      %v1200 = vsel %vm509, %v1195, %v1191
      %v1201 = vsel %vm509, %v1197, %v1193
      %v1202 = vmul.f32 %v1198, %v515
      %v1203 = vmul.f32 %v1200, %v516
      %v1204 = vmul.f32 %v1199, %v517
      %v1205 = vmul.f32 %v1201, %v518
      %v1206 = vpack.c.bf16 %v1204, %v1202
      %v1207 = vpack.c.bf16 %v1205, %v1203
      %1208 = vrot.lane.b32.xlu0 %v1089, 112
      %v1209 = vpop.permute.xlu0 %1208
      %1210 = vrot.lane.b32.xlu0 %v1091, 112
      %v1211 = vpop.permute.xlu0 %1210
      %1212 = vrot.lane.b32.xlu0 %v1090, 112
      %v1213 = vpop.permute.xlu0 %1212
      %1214 = vrot.lane.b32.xlu0 %v1092, 112
      %v1215 = vpop.permute.xlu0 %1214
      %v1216 = vsel %vm533, %v1209, %v1213
      %v1217 = vsel %vm533, %v1211, %v1215
      %v1218 = vsel %vm533, %v1213, %v1209
      %v1219 = vsel %vm533, %v1215, %v1211
      %v1220 = vmul.f32 %v1216, %v539
      %v1221 = vmul.f32 %v1218, %v540
      %v1222 = vmul.f32 %v1217, %v541
      %v1223 = vmul.f32 %v1219, %v542
      %v1224 = vpack.c.bf16 %v1222, %v1220
      %v1225 = vpack.c.bf16 %v1223, %v1221
      %1226 = vrot.lane.b32.xlu0 %v1089, 111
      %v1227 = vpop.permute.xlu0 %1226
      %1228 = vrot.lane.b32.xlu0 %v1091, 111
      %v1229 = vpop.permute.xlu0 %1228
      %1230 = vrot.lane.b32.xlu0 %v1090, 111
      %v1231 = vpop.permute.xlu0 %1230
      %1232 = vrot.lane.b32.xlu0 %v1092, 111
      %v1233 = vpop.permute.xlu0 %1232
      %v1234 = vsel %vm557, %v1227, %v1231
      %v1235 = vsel %vm557, %v1229, %v1233
      %v1236 = vsel %vm557, %v1231, %v1227
      %v1237 = vsel %vm557, %v1233, %v1229
      %v1238 = vmul.f32 %v1234, %v563
      %v1239 = vmul.f32 %v1236, %v564
      %v1240 = vmul.f32 %v1235, %v565
      %v1241 = vmul.f32 %v1237, %v566
      %v1242 = vpack.c.bf16 %v1240, %v1238
      %v1243 = vpack.c.bf16 %v1241, %v1239
      %v1244 = vld [vmem:[%s8] sm:$0xf]
      %1246 = vset.pattern.permute.xlu0 0
      %1247 = vperm.xlu0 %1246, %v1093
      %v1248 = vpop.permute.xlu0 %1247
      %v1252 = vunpack.c.l.s4 1983009808
      %v1253 = vunpack.c.0.s8 %v1252
      %v1254 = vlaneseq
      %v1255 = vshrl.u32 %v1254, 7
      %v1256 = vsub.s32 %v1253, %v1255
      %v1257 = vrot.slane %v1244, %v1256
      %v1258 = vcombine.high %v1257, %v1257
      %v1261 = vsel %vm584, %v1258, 0
      %1263 = vmatprep.subr.bf16.mxu0 %v1225
      %1264 = vmatpush1.bf16.msra.mxu0 %v1224
      %1265 = vmatprep.subr.bf16.mxu0 %v1207
      %1266 = vmatpush1.bf16.msra.mxu0 %v1206
      %1267 = vmatprep.subr.bf16.mxu0 %v1189
      %1268 = vmatpush1.bf16.msra.mxu0 %v1188
      %1269 = vmatprep.subr.bf16.mxu0 %v1171
      %1270 = vmatpush1.bf16.msra.mxu0 %v1170
      %1271 = vmatprep.subr.bf16.mxu0 %v1165
      %1272 = vmatpush1.bf16.msra.mxu0 %v1164
      %1273 = vmatprep.subr.bf16.mxu0 %v1147
      %1274 = vmatpush1.bf16.msra.mxu0 %v1146
      %1275 = vmatprep.subr.bf16.mxu0 %v1129
      %1276 = vmatpush1.bf16.msra.mxu0 %v1128
      %1277 = vmatprep.subr.bf16.mxu0 %v1111
      %1278 = vmatpush1.bf16.msra.mxu0 %v1110
      %1279 = vmatprep.subr.bf16.mxu0 0
      %1280 = vmatpush2.bf16.msra.mxu0 0
      %1281 = vmatprep.subr.bf16.mxu0 0
      %1282 = vmatpush2.bf16.msra.mxu0 0
      %1283 = vmatprep.subr.bf16.mxu0 0
      %1284 = vmatpush2.bf16.msra.mxu0 0
      %1285 = vmatprep.subr.bf16.mxu0 0
      %1286 = vmatpush2.bf16.msra.mxu0 0
      %1287 = vmatprep.subr.bf16.mxu0 0
      %1288 = vmatpush2.bf16.msra.mxu0 0
      %1289 = vmatprep.subr.bf16.mxu0 0
      %1290 = vmatpush2.bf16.msra.mxu0 0
      %1291 = vmatprep.subr.bf16.mxu0 0
      %1292 = vmatpush2.bf16.msra.mxu0 0
      %1293 = vmatprep.subr.bf16.mxu0 %v1243
      %1294 = vmatpush2.bf16.msra.mxu0 %v1242
      %1295 = vmatprep.mubr.bf16.mxu0 %v1261
      %1296 = vmatmul.mubr.bf16.gmra.mxu0 %v1257
      %v1297 = vpop.f32.mrf.mxu0
      %v1298 = vadd.f32 %v1248, %v1297
      %v1299 = vpop.f32.mrf.mxu0
      %v1300 = vadd.f32 %v1248, %v1299
      %v1301 = vpop.f32.mrf.mxu0
      %v1302 = vpop.f32.mrf.mxu0
      %1303 = vdwg.mxu0
      %v1304 = vsub.f32 0.0, %v1298
      %v1305 = vsub.f32 0.0, %v1300
      %v1306 = vmul.f32 %v1304, 1.442695
      %v1307 = vpow.pop %v1306
      %v1308 = vmul.f32 %v1305, 1.442695
      %v1309 = vpow.pop %v1308
      %v1310 = vadd.f32 %v1307, 1.0
      %v1311 = vadd.f32 %v1309, 1.0
      %v1312 = vrcp.pop %v1310
      %v1313 = vmul.f32 1.0, %v1312
      %v1314 = vrcp.pop %v1311
      %v1315 = vmul.f32 1.0, %v1314
      %v1318 = vcombine.low %v1313, %v1315
      %1320 = vst [vmem:[%s359] sm:$0xff] %v1318
      %p1321 = scmp.lt.s32.totalorder %s21, 1
      %s1322 = scalar_select %p1321, %s21, 1
      %s1323 = smul.addr %s1322, 2
      %s1324 = smul.addr %s1323, 4
      %s1325 = scalar_lea.vmem %s10, %s1324
      // Predicated region
      $region61: #{conv4deep3_forward.1} parent=59 // pred_check
        %p1326 = pneg %p254
      $region62: #{conv4deep3_forward.1} parent=59 // pred_check_branch
        %1328 = sbr.rel (%p1326) target = $region64
      $region63: #{conv4deep3_forward.1} parent=59 // pred_region
        _
      $region64: #{conv4deep3_forward.1} parent=59 // pred_fallthru
        _
    $region60: #{conv4deep3_forward.1} parent=5 // pred_fallthru
      _
    %p1329 = scmp.le.s32.totalorder 2, %s16
    // Predicated region
    $region65: #{conv4deep3_forward.1} parent=5 // pred_check
      %p1330 = pneg %p1329
    $region66: #{conv4deep3_forward.1} parent=5 // pred_check_branch
      %1332 = sbr.rel (%p1330) target = $region68
    $region67: #{conv4deep3_forward.1} parent=5 // pred_region
      %s1333 = ssub.s32 %s16, 2
      // Predicated region
      $region69: #{conv4deep3_forward.1} parent=67 // pred_check
        %p1334 = pneg %p260
      $region70: #{conv4deep3_forward.1} parent=67 // pred_check_branch
        %1336 = sbr.rel (%p1334) target = $region72
      $region71: #{conv4deep3_forward.1} parent=67 // pred_region
        %p1337 = scmp.lt.s32.totalorder %s22, 1
        %s1338 = scalar_select %p1337, %s22, 1
        %s1339 = smul.addr %s1338, 2
        %s1340 = smul.addr %s1339, 4
        %s1341 = scalar_lea.vmem %s10, %s1340
      $region72: #{conv4deep3_forward.1} parent=67 // pred_fallthru
        _
    $region68: #{conv4deep3_forward.1} parent=5 // pred_fallthru
      _
  $region6: #{conv4deep3_forward.1} parent=0 // loop_footer
    %s20 = sadd.s32 1, %s16
  $region7: #{conv4deep3_forward.1} parent=0 // loop_footer_branch
    %15 = sbr.rel target = $region3
  $region8: #{conv4deep3_forward.1} parent=0 // loop_exit
    _

</llo_original>
